<compile_context>
chip_gen: v5e
topology: v5e:2x2
jax: 0.10.0
libtpu: 0.0.40
codegen_flags: <defaults>
</compile_context>

<pallas_src>
import jax
import jax.numpy as jnp
from jax import lax
from jax.experimental import pallas as pl
from jax.experimental.pallas import tpu as pltpu


def _mamba_block_kernel(x_ref,        # (rows, Hp)      time-major, padded input tile
                        h0_ref,       # (b_pad, Hp)     initial GRU state
                        wi_ref,       # (Hp, 4*Hp) cdt  [W_ir^T | W_iz^T | W_in^T | W_gate^T]
                        bi_ref,       # (1, 4*Hp)  f32  [b_ir | b_iz | b_in | b_gate]
                        whh_ref,      # (Hp, 3*Hp) f32  [W_hr^T | W_hz^T | W_hn^T]
                        bhh_ref,      # (1, 3*Hp)  f32  [b_hr | b_hz | b_hn]
                        wo_ref,       # (Hp, Hp)   cdt  out_proj weight^T
                        bo_ref,       # (1, Hp)    f32
                        out_ref,      # (rows, Hp)      final_output tile
                        hT_ref,       # (b_pad, Hp)     new_state (written on last tile)
                        h_scr,        # VMEM (b_pad, Hp) f32     carried hidden state
                        g_scr):       # VMEM (rows, 4*Hp) f32    [gated/GI_r|GI_z|GI_n|gate]
    f32 = jnp.float32
    cdt = wi_ref.dtype                       # matmul-input dtype for hoisted/out matmuls

    b_pad, Hp = h0_ref.shape
    rows = x_ref.shape[0]
    t_tile = rows // b_pad

    ti = pl.program_id(0)
    nt = pl.num_programs(0)

    @pl.when(ti == 0)
    def _init():
        h_scr[...] = h0_ref[...].astype(f32)

    # ---- hoisted phase: ONE fused (rows, Hp) x (Hp, 4Hp) matmul (MXU-dense) ----
    x_tile = x_ref[...].astype(cdt)
    g_scr[...] = (jnp.dot(x_tile, wi_ref[...], preferred_element_type=f32)
                  + bi_ref[...])
    # sigmoid fix-up of the gate band (off the serial critical path)
    gate_band = pl.ds(3 * Hp, Hp)
    g_scr[:, gate_band] = jax.nn.sigmoid(g_scr[:, gate_band])

    # ---- sequential recurrence: one fused h_prev @ W_hh_cat matmul per step ----
    if t_tile % 4 == 0:
        unroll = 4
    elif t_tile % 2 == 0:
        unroll = 2
    else:
        unroll = 1

    def one_step(t, h_prev):
        row = pl.multiple_of(t * b_pad, 8)                # 8-aligned sublane offset
        gi = g_scr[pl.ds(row, b_pad), :]                  # (b_pad, 4Hp) one load
        gh = (jnp.dot(h_prev, whh_ref[...], preferred_element_type=f32)
              + bhh_ref[...])                             # (b_pad, 3Hp), f32 recurrence
        r = jax.nn.sigmoid(gi[:, :Hp] + gh[:, :Hp])
        z = jax.nn.sigmoid(gi[:, Hp:2 * Hp] + gh[:, Hp:2 * Hp])
        n = jnp.tanh(gi[:, 2 * Hp:3 * Hp] + r * gh[:, 2 * Hp:3 * Hp])
        h_new = n + z * (h_prev - n)                      # GRU output at step t
        gate = gi[:, 3 * Hp:]
        x_t = x_ref[pl.ds(row, b_pad), :].astype(f32)
        gated = gate * (h_new - x_t) + x_t                # gate*h + (1-gate)*x
        # reclaim the (dead) GI_r band as the out_proj input buffer
        g_scr[pl.ds(row, b_pad), pl.ds(0, Hp)] = gated
        return h_new

    def step_group(g, h_prev):
        h = h_prev
        for u in range(unroll):                           # manual unroll for LLO visibility
            h = one_step(g * unroll + u, h)
        return h

    h_last = lax.fori_loop(0, t_tile // unroll, step_group, h_scr[...])
    h_scr[...] = h_last                                   # persist across grid steps

    # ---- hoisted out_proj: one big lane-dense matmul + one block store ----
    gated_all = g_scr[:, pl.ds(0, Hp)].astype(cdt)
    y = jnp.dot(gated_all, wo_ref[...], preferred_element_type=f32) + bo_ref[...]
    out_ref[...] = y.astype(out_ref.dtype)

    @pl.when(ti == nt - 1)
    def _final():
        hT_ref[...] = h_last.astype(hT_ref.dtype)


def _pad2(w, r, c):
    """Zero-pad a 2-D weight to (r, c)."""
    return jnp.zeros((r, c), w.dtype).at[:w.shape[0], :w.shape[1]].set(w)


def _pad1(b, n):
    return jnp.zeros((n,), b.dtype).at[:b.shape[0]].set(b)


def _vmem_capacity_bytes():
    try:
        return int(pltpu.get_tpu_info().vmem_capacity_bytes)
    except Exception:
        return 64 * 1024 * 1024                            # conservative (v7x-sized)


def simplified_mamba_block(hidden_states, params, state=None, *,
                           t_tile=None, compute_dtype=jnp.float32,
                           vmem_budget_bytes=None):
    """hidden_states: (B, T, H). Returns (final_output (B,T,H), new_state (1,B,H))."""
    B, T, H = hidden_states.shape
    dtype = hidden_states.dtype
    cdt = jnp.dtype(compute_dtype)
    f32 = jnp.float32

    Hp = ((H + 127) // 128) * 128                          # lane-aligned hidden size
    b_pad = max(8, ((B + 7) // 8) * 8)                     # sublane-aligned batch

    # ---- gate-fused, pre-transposed, zero-padded weights (PyTorch order r|z|n) ----
    w_ih = params["w_ih"].astype(f32)                      # (3H, H)
    w_hh = params["w_hh"].astype(f32)
    b_ih = params["b_ih"].astype(f32)                      # (3H,)
    b_hh = params["b_hh"].astype(f32)

    wi_blocks = [_pad2(w_ih[g * H:(g + 1) * H].T, Hp, Hp) for g in range(3)]
    wi_blocks.append(_pad2(params["w_gate"].astype(f32).T, Hp, Hp))
    wi_cat = jnp.concatenate(wi_blocks, axis=1).astype(cdt)          # (Hp, 4Hp)

    bi_blocks = [_pad1(b_ih[g * H:(g + 1) * H], Hp) for g in range(3)]
    bi_blocks.append(_pad1(params["b_gate"].astype(f32), Hp))
    bi_cat = jnp.concatenate(bi_blocks).reshape(1, 4 * Hp)           # (1, 4Hp) f32

    whh_blocks = [_pad2(w_hh[g * H:(g + 1) * H].T, Hp, Hp) for g in range(3)]
    whh_cat = jnp.concatenate(whh_blocks, axis=1)                    # (Hp, 3Hp) f32
    bhh_blocks = [_pad1(b_hh[g * H:(g + 1) * H], Hp) for g in range(3)]
    bhh_cat = jnp.concatenate(bhh_blocks).reshape(1, 3 * Hp)         # (1, 3Hp) f32

    wo_t = _pad2(params["w_out"].astype(f32).T, Hp, Hp).astype(cdt)  # (Hp, Hp)
    bo = _pad1(params["b_out"].astype(f32), Hp).reshape(1, Hp)       # (1, Hp) f32

    # ---- activations: time-major, batch/H padded, flattened to 2-D ----
    if state is None:
        h0 = jnp.zeros((B, H), dtype)
    else:
        h0 = state.reshape(B, H).astype(dtype)
    h0_p = jnp.zeros((b_pad, Hp), dtype).at[:B, :H].set(h0)

    x_tm = jnp.transpose(hidden_states, (1, 0, 2))                   # (T, B, H)
    x_p = jnp.zeros((T, b_pad, Hp), dtype).at[:, :B, :H].set(x_tm)
    x2d = x_p.reshape(T * b_pad, Hp)

    # ---- tiling / VMEM sizing ----
    in_isz = jnp.dtype(dtype).itemsize
    out_isz = in_isz
    cdt_isz = jnp.dtype(cdt).itemsize

    cap = _vmem_capacity_bytes()
    if vmem_budget_bytes is None:
        vmem_budget_bytes = int(cap * 0.70)                # ~90 MiB on 128 MiB parts, ~45 MiB on v7x

    weights_bytes = Hp * Hp * (5 * cdt_isz + 12) + 8 * Hp * 4
    fixed_bytes = 2 * weights_bytes + 3 * b_pad * Hp * 4   # dbl-buffered weights + h0 + h_scr
    per_row = Hp * (2 * in_isz + 2 * out_isz + 16)         # dbl-buffered x/out + fused scratch

    if t_tile is None:
        avail = max(vmem_budget_bytes - fixed_bytes, per_row * b_pad)
        max_t = max(1, int(avail // (per_row * b_pad)))
        max_t = min(max_t, 512, T)
        t_tile = 1
        for cand in range(max_t, 0, -1):
            if T % cand == 0:
                t_tile = cand
                break
    assert T % t_tile == 0, "t_tile must divide T"
    rows = t_tile * b_pad
    n_tiles = T // t_tile

    est_bytes = fixed_bytes + per_row * rows
    vmem_limit = int(min(max(est_bytes * 1.25, 32 * 1024 * 1024), int(cap * 0.85)))

    flops = int(16 * T * b_pad * Hp * Hp)                  # hoisted(8) + recur(6) + out(2)
    transcendentals = int(4 * T * b_pad * Hp)              # sigmoid r,z,gate + tanh n
    bytes_accessed = int(T * b_pad * Hp * (in_isz + out_isz)
                         + Hp * Hp * (5 * cdt_isz + 12)
                         + 2 * b_pad * Hp * in_isz)

    grid_spec = pltpu.PrefetchScalarGridSpec(
        num_scalar_prefetch=0,
        grid=(n_tiles,),
        in_specs=[
            pl.BlockSpec((rows, Hp), lambda t: (t, 0)),          # x tile
            pl.BlockSpec((b_pad, Hp), lambda t: (0, 0)),         # h0
            pl.BlockSpec((Hp, 4 * Hp), lambda t: (0, 0)),        # fused W_ih|W_gate
            pl.BlockSpec((1, 4 * Hp), lambda t: (0, 0)),         # fused b_ih|b_gate
            pl.BlockSpec((Hp, 3 * Hp), lambda t: (0, 0)),        # fused W_hh (f32)
            pl.BlockSpec((1, 3 * Hp), lambda t: (0, 0)),         # fused b_hh
            pl.BlockSpec((Hp, Hp), lambda t: (0, 0)),            # W_out^T
            pl.BlockSpec((1, Hp), lambda t: (0, 0)),             # b_out
        ],
        out_specs=(
            pl.BlockSpec((rows, Hp), lambda t: (t, 0)),          # final_output tile
            pl.BlockSpec((b_pad, Hp), lambda t: (0, 0)),         # new_state
        ),
        scratch_shapes=[
            pltpu.VMEM((b_pad, Hp), jnp.float32),                # carried hidden state
            pltpu.VMEM((rows, 4 * Hp), jnp.float32),             # fused GI/gate/gated scratch
        ],
    )

    out2d, hT_p = pl.pallas_call(
        _mamba_block_kernel,
        out_shape=(jax.ShapeDtypeStruct((T * b_pad, Hp), dtype),
                   jax.ShapeDtypeStruct((b_pad, Hp), dtype)),
        grid_spec=grid_spec,
        compiler_params=pltpu.CompilerParams(
            dimension_semantics=("arbitrary",),                  # sequential recurrence
            vmem_limit_bytes=vmem_limit),
        cost_estimate=pl.CostEstimate(flops=flops,
                                      transcendentals=transcendentals,
                                      bytes_accessed=bytes_accessed),
    )(x2d, h0_p, wi_cat, bi_cat, whh_cat, bhh_cat, wo_t, bo)

    final_output = jnp.transpose(out2d.reshape(T, b_pad, Hp)[:, :B, :H], (1, 0, 2))
    new_state = hT_p[:B, :H][None]                               # (1, B, H) like PyTorch GRU
    return final_output, new_state


def _reference_forward(hidden_states, params, state=None):
    """Pure-JAX reference matching torch semantics (for correctness check)."""
    B, T, H = hidden_states.shape
    h0 = jnp.zeros((B, H), hidden_states.dtype) if state is None else state.reshape(B, H)

    def step(h, x_t):
        gi = x_t @ params["w_ih"].T + params["b_ih"]
        gh = h @ params["w_hh"].T + params["b_hh"]
        r = jax.nn.sigmoid(gi[:, :H] + gh[:, :H])
        z = jax.nn.sigmoid(gi[:, H:2 * H] + gh[:, H:2 * H])
        n = jnp.tanh(gi[:, 2 * H:] + r * gh[:, 2 * H:])
        h_new = (1.0 - z) * n + z * h
        return h_new, h_new

    hT, outs = lax.scan(step, h0, jnp.transpose(hidden_states, (1, 0, 2)))
    output = jnp.transpose(outs, (1, 0, 2))
    gate = jax.nn.sigmoid(hidden_states @ params["w_gate"].T + params["b_gate"])
    gated = gate * output + (1.0 - gate) * hidden_states
    final = gated @ params["w_out"].T + params["b_out"]
    return final, hT[None]


def _init_params(key, hidden_size):
    """Deterministic init matching the shapes of nn.GRU / nn.Linear in the module."""
    H = hidden_size
    bound = 1.0 / (H ** 0.5)
    ks = jax.random.split(key, 8)
    u = lambda k, shape: jax.random.uniform(k, shape, jnp.float32, -bound, bound)
    return {
        "w_ih": u(ks[0], (3 * H, H)),   # GRU weight_ih_l0  [r|z|n]
        "w_hh": u(ks[1], (3 * H, H)),   # GRU weight_hh_l0
        "b_ih": u(ks[2], (3 * H,)),     # GRU bias_ih_l0
        "b_hh": u(ks[3], (3 * H,)),     # GRU bias_hh_l0
        "w_gate": u(ks[4], (H, H)),     # gate_proj.weight
        "b_gate": u(ks[5], (H,)),       # gate_proj.bias
        "w_out": u(ks[6], (H, H)),      # out_proj.weight
        "b_out": u(ks[7], (H,)),        # out_proj.bias
    }


if __name__ == "__main__":
    key = jax.random.PRNGKey(0)
    k_x, k_p, k_s, k_x2, k_p2, k_s2 = jax.random.split(key, 6)

    # Tolerances account for MXU bf16-pass f32 matmul precision differences vs.
    # the XLA reference; logic/layout bugs would produce O(1) errors.
    TOL = dict(atol=2e-2, rtol=2e-2)

    # --- small shapes consistent with the module (B=2, T=8, H=32) ---
    B, T, H = 2, 8, 32
    x = jax.random.normal(k_x, (B, T, H), jnp.float32)
    params = _init_params(k_p, H)
    state0 = 0.1 * jax.random.normal(k_s, (1, B, H), jnp.float32)

    ref_out, ref_st = _reference_forward(x, params, state=None)

    # f32 matmul path, no initial state
    out_f32, st_f32 = simplified_mamba_block(x, params, state=None)
    jax.block_until_ready((out_f32, st_f32))
    assert out_f32.shape == (B, T, H) and st_f32.shape == (1, B, H)
    assert jnp.allclose(out_f32, ref_out, **TOL)
    assert jnp.allclose(st_f32, ref_st, **TOL)

    # f32 matmul path with an explicit initial state
    out_s, st_s = simplified_mamba_block(x, params, state=state0)
    jax.block_until_ready((out_s, st_s))
    ref_out_s, ref_st_s = _reference_forward(x, params, state=state0)
    assert jnp.allclose(out_s, ref_out_s, **TOL)
    assert jnp.allclose(st_s, ref_st_s, **TOL)

    # bf16 matmul-input path (hoisted/out matmuls only; recurrence stays f32)
    out_bf, st_bf = simplified_mamba_block(x, params, state=None,
                                           compute_dtype=jnp.bfloat16)
    jax.block_until_ready((out_bf, st_bf))
    assert jnp.allclose(out_bf, ref_out, atol=1e-1, rtol=1e-1)
    assert jnp.allclose(st_bf, ref_st, atol=1e-1, rtol=1e-1)

    # --- awkward shapes: multi-tile grid (state carry), H/B padding paths ---
    B2, T2, H2 = 3, 12, 40
    x2 = jax.random.normal(k_x2, (B2, T2, H2), jnp.float32)
    params2 = _init_params(k_p2, H2)
    state2 = 0.1 * jax.random.normal(k_s2, (1, B2, H2), jnp.float32)
    out_2, st_2 = simplified_mamba_block(x2, params2, state=state2, t_tile=3)
    jax.block_until_ready((out_2, st_2))
    ref_out2, ref_st2 = _reference_forward(x2, params2, state=state2)
    assert out_2.shape == (B2, T2, H2) and st_2.shape == (1, B2, H2)
    assert jnp.allclose(out_2, ref_out2, **TOL)
    assert jnp.allclose(st_2, ref_st2, **TOL)

    print("KERNEL_OK")
</pallas_src>

<mosaic_0001>
module attributes {stable_mosaic.version = 11 : i64} {
  func.func @_mamba_block_kernel(%arg0: i32, %arg1: memref<64x128xf32, #tpu.memory_space<vmem>>, %arg2: memref<8x128xf32, #tpu.memory_space<vmem>>, %arg3: memref<128x512xf32, #tpu.memory_space<vmem>>, %arg4: memref<1x512xf32, #tpu.memory_space<vmem>>, %arg5: memref<128x384xf32, #tpu.memory_space<vmem>>, %arg6: memref<1x384xf32, #tpu.memory_space<vmem>>, %arg7: memref<128x128xf32, #tpu.memory_space<vmem>>, %arg8: memref<1x128xf32, #tpu.memory_space<vmem>>, %arg9: memref<64x128xf32, #tpu.memory_space<vmem>>, %arg10: memref<8x128xf32, #tpu.memory_space<vmem>>, %arg11: memref<8x128xf32, #tpu.memory_space<vmem>>, %arg12: memref<64x512xf32, #tpu.memory_space<vmem>>) attributes {dimension_semantics = [#tpu.dimension_semantics<arbitrary>], iteration_bounds = array<i64: 1>, scalar_prefetch = 0 : i64, scratch_operands = 2 : i64, tpu.core_type = #tpu.core_type<tc>, window_params = [{transform_indices = @transform_0, window_bounds = array<i64: 64, 128>}, {pipeline_mode = #tpu.pipeline_mode<synchronous>, transform_indices = @transform_1, window_bounds = array<i64: 8, 128>}, {pipeline_mode = #tpu.pipeline_mode<synchronous>, transform_indices = @transform_2, window_bounds = array<i64: 128, 512>}, {pipeline_mode = #tpu.pipeline_mode<synchronous>, transform_indices = @transform_3, window_bounds = array<i64: 1, 512>}, {pipeline_mode = #tpu.pipeline_mode<synchronous>, transform_indices = @transform_4, window_bounds = array<i64: 128, 384>}, {pipeline_mode = #tpu.pipeline_mode<synchronous>, transform_indices = @transform_5, window_bounds = array<i64: 1, 384>}, {pipeline_mode = #tpu.pipeline_mode<synchronous>, transform_indices = @transform_6, window_bounds = array<i64: 128, 128>}, {pipeline_mode = #tpu.pipeline_mode<synchronous>, transform_indices = @transform_7, window_bounds = array<i64: 1, 128>}, {transform_indices = @transform_8, window_bounds = array<i64: 64, 128>}, {pipeline_mode = #tpu.pipeline_mode<synchronous>, transform_indices = @transform_9, window_bounds = array<i64: 8, 128>}]} {
    %c0_i32 = arith.constant 0 : i32
    %0 = arith.cmpi eq, %arg0, %c0_i32 : i32
    %1 = arith.extui %0 : i1 to i32
    %c0_i32_0 = arith.constant 0 : i32
    %2 = arith.cmpi ne, %1, %c0_i32_0 : i32
    scf.if %2 {
      %c0_29 = arith.constant 0 : index
      %c0_30 = arith.constant 0 : index
      %31 = vector.load %arg2[%c0_29, %c0_30] : memref<8x128xf32, #tpu.memory_space<vmem>>, vector<8x128xf32>
      %c0_31 = arith.constant 0 : index
      %c0_32 = arith.constant 0 : index
      %32 = vector.load %arg11[%c0_31, %c0_32] : memref<8x128xf32, #tpu.memory_space<vmem>>, vector<8x128xf32>
      tpu.vector_store %arg11[%c0_31, %c0_32], %31 {strides = array<i32>} : memref<8x128xf32, #tpu.memory_space<vmem>>, vector<8x128xf32>,
    } else {
    }
    %c0 = arith.constant 0 : index
    %c0_1 = arith.constant 0 : index
    %3 = vector.load %arg1[%c0, %c0_1] : memref<64x128xf32, #tpu.memory_space<vmem>>, vector<64x128xf32>
    %c0_2 = arith.constant 0 : index
    %c0_3 = arith.constant 0 : index
    %4 = vector.load %arg3[%c0_2, %c0_3] : memref<128x512xf32, #tpu.memory_space<vmem>>, vector<128x512xf32>
    %cst = arith.constant dense<0.000000e+00> : vector<64x512xf32>
    %5 = tpu.matmul %3, %4, %cst {dimension_numbers = #tpu.dot_dimension_numbers<[1], [0], [0], [1], [0, 0, 1, 1], [], []>} : vector<64x128xf32>, vector<128x512xf32>, vector<64x512xf32> -> vector<64x512xf32>
    %c0_4 = arith.constant 0 : index
    %c0_5 = arith.constant 0 : index
    %6 = vector.load %arg4[%c0_4, %c0_5] : memref<1x512xf32, #tpu.memory_space<vmem>>, vector<1x512xf32>
    %7 = vector.broadcast %6 : vector<1x512xf32> to vector<64x512xf32>
    %8 = arith.addf %5, %7 : vector<64x512xf32>
    %c0_6 = arith.constant 0 : index
    %c0_7 = arith.constant 0 : index
    %9 = vector.load %arg12[%c0_6, %c0_7] : memref<64x512xf32, #tpu.memory_space<vmem>>, vector<64x512xf32>
    tpu.vector_store %arg12[%c0_6, %c0_7], %8 {strides = array<i32>} : memref<64x512xf32, #tpu.memory_space<vmem>>, vector<64x512xf32>,
    %c0_8 = arith.constant 0 : index
    %c384 = arith.constant 384 : index
    %10 = vector.load %arg12[%c0_8, %c384] : memref<64x512xf32, #tpu.memory_space<vmem>>, vector<64x128xf32>
    %11 = arith.negf %10 : vector<64x128xf32>
    %12 = math.exp %11 : vector<64x128xf32>
    %cst_9 = arith.constant 1.000000e+00 : f32
    %13 = vector.broadcast %cst_9 : f32 to vector<64x128xf32>
    %14 = arith.addf %13, %12 : vector<64x128xf32>
    %15 = arith.divf %13, %14 : vector<64x128xf32>
    %c0_10 = arith.constant 0 : index
    %c384_11 = arith.constant 384 : index
    %16 = vector.load %arg12[%c0_10, %c384_11] : memref<64x512xf32, #tpu.memory_space<vmem>>, vector<64x128xf32>
    tpu.vector_store %arg12[%c0_10, %c384_11], %15 {strides = array<i32>} : memref<64x512xf32, #tpu.memory_space<vmem>>, vector<64x128xf32>,
    %c0_12 = arith.constant 0 : index
    %c0_13 = arith.constant 0 : index
    %17 = vector.load %arg11[%c0_12, %c0_13] : memref<8x128xf32, #tpu.memory_space<vmem>>, vector<8x128xf32>
    %c0_i32_14 = arith.constant 0 : i32
    %c2_i32 = arith.constant 2 : i32
    %18 = arith.addi %c0_i32_14, %c2_i32 : i32
    %c1_i32 = arith.constant 1 : i32
    %19 = scf.for %arg13 = %c0_i32_14 to %18 step %c1_i32 iter_args(%arg14 = %17) -> (vector<8x128xf32>)  : i32 {
      %c4_i32 = arith.constant 4 : i32
      %31 = arith.muli %arg13, %c4_i32 : i32
      %c0_i32_29 = arith.constant 0 : i32
      %32 = arith.addi %31, %c0_i32_29 : i32
      %c8_i32 = arith.constant 8 : i32
      %33 = arith.muli %32, %c8_i32 : i32
      %34 = tpu.assume_multiple %33, 8 : i32
      %35 = arith.index_cast %34 : i32 to index
      %c0_30 = arith.constant 0 : index
      %36 = vector.load %arg12[%35, %c0_30] : memref<64x512xf32, #tpu.memory_space<vmem>>, vector<8x512xf32>
      %c0_31 = arith.constant 0 : index
      %c0_32 = arith.constant 0 : index
      %37 = vector.load %arg5[%c0_31, %c0_32] : memref<128x384xf32, #tpu.memory_space<vmem>>, vector<128x384xf32>
      %cst_33 = arith.constant dense<0.000000e+00> : vector<8x384xf32>
      %38 = tpu.matmul %arg14, %37, %cst_33 {dimension_numbers = #tpu.dot_dimension_numbers<[1], [0], [0], [1], [0, 0, 1, 1], [], []>} : vector<8x128xf32>, vector<128x384xf32>, vector<8x384xf32> -> vector<8x384xf32>
      %c0_34 = arith.constant 0 : index
      %c0_35 = arith.constant 0 : index
      %39 = vector.load %arg6[%c0_34, %c0_35] : memref<1x384xf32, #tpu.memory_space<vmem>>, vector<1x384xf32>
      %40 = vector.broadcast %39 : vector<1x384xf32> to vector<8x384xf32>
      %41 = arith.addf %38, %40 : vector<8x384xf32>
      %42 = vector.extract_strided_slice %36 {offsets = [0, 0], sizes = [8, 128], strides = [1, 1]} : vector<8x512xf32> to vector<8x128xf32>
      %43 = vector.extract_strided_slice %41 {offsets = [0, 0], sizes = [8, 128], strides = [1, 1]} : vector<8x384xf32> to vector<8x128xf32>
      %44 = arith.addf %42, %43 : vector<8x128xf32>
      %45 = arith.negf %44 : vector<8x128xf32>
      %46 = math.exp %45 : vector<8x128xf32>
      %cst_36 = arith.constant 1.000000e+00 : f32
      %47 = vector.broadcast %cst_36 : f32 to vector<8x128xf32>
      %48 = arith.addf %47, %46 : vector<8x128xf32>
      %49 = arith.divf %47, %48 : vector<8x128xf32>
      %50 = vector.extract_strided_slice %36 {offsets = [0, 128], sizes = [8, 128], strides = [1, 1]} : vector<8x512xf32> to vector<8x128xf32>
      %51 = vector.extract_strided_slice %41 {offsets = [0, 128], sizes = [8, 128], strides = [1, 1]} : vector<8x384xf32> to vector<8x128xf32>
      %52 = arith.addf %50, %51 : vector<8x128xf32>
      %53 = arith.negf %52 : vector<8x128xf32>
      %54 = math.exp %53 : vector<8x128xf32>
      %cst_37 = arith.constant 1.000000e+00 : f32
      %55 = vector.broadcast %cst_37 : f32 to vector<8x128xf32>
      %56 = arith.addf %55, %54 : vector<8x128xf32>
      %57 = arith.divf %55, %56 : vector<8x128xf32>
      %58 = vector.extract_strided_slice %36 {offsets = [0, 256], sizes = [8, 128], strides = [1, 1]} : vector<8x512xf32> to vector<8x128xf32>
      %59 = vector.extract_strided_slice %41 {offsets = [0, 256], sizes = [8, 128], strides = [1, 1]} : vector<8x384xf32> to vector<8x128xf32>
      %60 = arith.mulf %49, %59 : vector<8x128xf32>
      %61 = arith.addf %58, %60 : vector<8x128xf32>
      %62 = math.tanh %61 : vector<8x128xf32>
      %63 = arith.subf %arg14, %62 : vector<8x128xf32>
      %64 = arith.mulf %57, %63 : vector<8x128xf32>
      %65 = arith.addf %62, %64 : vector<8x128xf32>
      %66 = vector.extract_strided_slice %36 {offsets = [0, 384], sizes = [8, 128], strides = [1, 1]} : vector<8x512xf32> to vector<8x128xf32>
      %67 = arith.index_cast %34 : i32 to index
      %c0_38 = arith.constant 0 : index
      %68 = vector.load %arg1[%67, %c0_38] : memref<64x128xf32, #tpu.memory_space<vmem>>, vector<8x128xf32>
      %69 = arith.subf %65, %68 : vector<8x128xf32>
      %70 = arith.mulf %66, %69 : vector<8x128xf32>
      %71 = arith.addf %70, %68 : vector<8x128xf32>
      %72 = arith.index_cast %34 : i32 to index
      %c0_39 = arith.constant 0 : index
      %73 = vector.load %arg12[%72, %c0_39] : memref<64x512xf32, #tpu.memory_space<vmem>>, vector<8x128xf32>
      tpu.vector_store %arg12[%72, %c0_39], %71 {strides = array<i32>} : memref<64x512xf32, #tpu.memory_space<vmem>>, vector<8x128xf32>,
      %c4_i32_40 = arith.constant 4 : i32
      %74 = arith.muli %arg13, %c4_i32_40 : i32
      %c1_i32_41 = arith.constant 1 : i32
      %75 = arith.addi %74, %c1_i32_41 : i32
      %c8_i32_42 = arith.constant 8 : i32
      %76 = arith.muli %75, %c8_i32_42 : i32
      %77 = tpu.assume_multiple %76, 8 : i32
      %78 = arith.index_cast %77 : i32 to index
      %c0_43 = arith.constant 0 : index
      %79 = vector.load %arg12[%78, %c0_43] : memref<64x512xf32, #tpu.memory_space<vmem>>, vector<8x512xf32>
      %c0_44 = arith.constant 0 : index
      %c0_45 = arith.constant 0 : index
      %80 = vector.load %arg5[%c0_44, %c0_45] : memref<128x384xf32, #tpu.memory_space<vmem>>, vector<128x384xf32>
      %cst_46 = arith.constant dense<0.000000e+00> : vector<8x384xf32>
      %81 = tpu.matmul %65, %80, %cst_46 {dimension_numbers = #tpu.dot_dimension_numbers<[1], [0], [0], [1], [0, 0, 1, 1], [], []>} : vector<8x128xf32>, vector<128x384xf32>, vector<8x384xf32> -> vector<8x384xf32>
      %c0_47 = arith.constant 0 : index
      %c0_48 = arith.constant 0 : index
      %82 = vector.load %arg6[%c0_47, %c0_48] : memref<1x384xf32, #tpu.memory_space<vmem>>, vector<1x384xf32>
      %83 = vector.broadcast %82 : vector<1x384xf32> to vector<8x384xf32>
      %84 = arith.addf %81, %83 : vector<8x384xf32>
      %85 = vector.extract_strided_slice %79 {offsets = [0, 0], sizes = [8, 128], strides = [1, 1]} : vector<8x512xf32> to vector<8x128xf32>
      %86 = vector.extract_strided_slice %84 {offsets = [0, 0], sizes = [8, 128], strides = [1, 1]} : vector<8x384xf32> to vector<8x128xf32>
      %87 = arith.addf %85, %86 : vector<8x128xf32>
      %88 = arith.negf %87 : vector<8x128xf32>
      %89 = math.exp %88 : vector<8x128xf32>
      %cst_49 = arith.constant 1.000000e+00 : f32
      %90 = vector.broadcast %cst_49 : f32 to vector<8x128xf32>
      %91 = arith.addf %90, %89 : vector<8x128xf32>
      %92 = arith.divf %90, %91 : vector<8x128xf32>
      %93 = vector.extract_strided_slice %79 {offsets = [0, 128], sizes = [8, 128], strides = [1, 1]} : vector<8x512xf32> to vector<8x128xf32>
      %94 = vector.extract_strided_slice %84 {offsets = [0, 128], sizes = [8, 128], strides = [1, 1]} : vector<8x384xf32> to vector<8x128xf32>
      %95 = arith.addf %93, %94 : vector<8x128xf32>
      %96 = arith.negf %95 : vector<8x128xf32>
      %97 = math.exp %96 : vector<8x128xf32>
      %cst_50 = arith.constant 1.000000e+00 : f32
      %98 = vector.broadcast %cst_50 : f32 to vector<8x128xf32>
      %99 = arith.addf %98, %97 : vector<8x128xf32>
      %100 = arith.divf %98, %99 : vector<8x128xf32>
      %101 = vector.extract_strided_slice %79 {offsets = [0, 256], sizes = [8, 128], strides = [1, 1]} : vector<8x512xf32> to vector<8x128xf32>
      %102 = vector.extract_strided_slice %84 {offsets = [0, 256], sizes = [8, 128], strides = [1, 1]} : vector<8x384xf32> to vector<8x128xf32>
      %103 = arith.mulf %92, %102 : vector<8x128xf32>
      %104 = arith.addf %101, %103 : vector<8x128xf32>
      %105 = math.tanh %104 : vector<8x128xf32>
      %106 = arith.subf %65, %105 : vector<8x128xf32>
      %107 = arith.mulf %100, %106 : vector<8x128xf32>
      %108 = arith.addf %105, %107 : vector<8x128xf32>
      %109 = vector.extract_strided_slice %79 {offsets = [0, 384], sizes = [8, 128], strides = [1, 1]} : vector<8x512xf32> to vector<8x128xf32>
      %110 = arith.index_cast %77 : i32 to index
      %c0_51 = arith.constant 0 : index
      %111 = vector.load %arg1[%110, %c0_51] : memref<64x128xf32, #tpu.memory_space<vmem>>, vector<8x128xf32>
      %112 = arith.subf %108, %111 : vector<8x128xf32>
      %113 = arith.mulf %109, %112 : vector<8x128xf32>
      %114 = arith.addf %113, %111 : vector<8x128xf32>
      %115 = arith.index_cast %77 : i32 to index
      %c0_52 = arith.constant 0 : index
      %116 = vector.load %arg12[%115, %c0_52] : memref<64x512xf32, #tpu.memory_space<vmem>>, vector<8x128xf32>
      tpu.vector_store %arg12[%115, %c0_52], %114 {strides = array<i32>} : memref<64x512xf32, #tpu.memory_space<vmem>>, vector<8x128xf32>,
      %c4_i32_53 = arith.constant 4 : i32
      %117 = arith.muli %arg13, %c4_i32_53 : i32
      %c2_i32_54 = arith.constant 2 : i32
      %118 = arith.addi %117, %c2_i32_54 : i32
      %c8_i32_55 = arith.constant 8 : i32
      %119 = arith.muli %118, %c8_i32_55 : i32
      %120 = tpu.assume_multiple %119, 8 : i32
      %121 = arith.index_cast %120 : i32 to index
      %c0_56 = arith.constant 0 : index
      %122 = vector.load %arg12[%121, %c0_56] : memref<64x512xf32, #tpu.memory_space<vmem>>, vector<8x512xf32>
      %c0_57 = arith.constant 0 : index
      %c0_58 = arith.constant 0 : index
      %123 = vector.load %arg5[%c0_57, %c0_58] : memref<128x384xf32, #tpu.memory_space<vmem>>, vector<128x384xf32>
      %cst_59 = arith.constant dense<0.000000e+00> : vector<8x384xf32>
      %124 = tpu.matmul %108, %123, %cst_59 {dimension_numbers = #tpu.dot_dimension_numbers<[1], [0], [0], [1], [0, 0, 1, 1], [], []>} : vector<8x128xf32>, vector<128x384xf32>, vector<8x384xf32> -> vector<8x384xf32>
      %c0_60 = arith.constant 0 : index
      %c0_61 = arith.constant 0 : index
      %125 = vector.load %arg6[%c0_60, %c0_61] : memref<1x384xf32, #tpu.memory_space<vmem>>, vector<1x384xf32>
      %126 = vector.broadcast %125 : vector<1x384xf32> to vector<8x384xf32>
      %127 = arith.addf %124, %126 : vector<8x384xf32>
      %128 = vector.extract_strided_slice %122 {offsets = [0, 0], sizes = [8, 128], strides = [1, 1]} : vector<8x512xf32> to vector<8x128xf32>
      %129 = vector.extract_strided_slice %127 {offsets = [0, 0], sizes = [8, 128], strides = [1, 1]} : vector<8x384xf32> to vector<8x128xf32>
      %130 = arith.addf %128, %129 : vector<8x128xf32>
      %131 = arith.negf %130 : vector<8x128xf32>
      %132 = math.exp %131 : vector<8x128xf32>
      %cst_62 = arith.constant 1.000000e+00 : f32
      %133 = vector.broadcast %cst_62 : f32 to vector<8x128xf32>
      %134 = arith.addf %133, %132 : vector<8x128xf32>
      %135 = arith.divf %133, %134 : vector<8x128xf32>
      %136 = vector.extract_strided_slice %122 {offsets = [0, 128], sizes = [8, 128], strides = [1, 1]} : vector<8x512xf32> to vector<8x128xf32>
      %137 = vector.extract_strided_slice %127 {offsets = [0, 128], sizes = [8, 128], strides = [1, 1]} : vector<8x384xf32> to vector<8x128xf32>
      %138 = arith.addf %136, %137 : vector<8x128xf32>
      %139 = arith.negf %138 : vector<8x128xf32>
      %140 = math.exp %139 : vector<8x128xf32>
      %cst_63 = arith.constant 1.000000e+00 : f32
      %141 = vector.broadcast %cst_63 : f32 to vector<8x128xf32>
      %142 = arith.addf %141, %140 : vector<8x128xf32>
      %143 = arith.divf %141, %142 : vector<8x128xf32>
      %144 = vector.extract_strided_slice %122 {offsets = [0, 256], sizes = [8, 128], strides = [1, 1]} : vector<8x512xf32> to vector<8x128xf32>
      %145 = vector.extract_strided_slice %127 {offsets = [0, 256], sizes = [8, 128], strides = [1, 1]} : vector<8x384xf32> to vector<8x128xf32>
      %146 = arith.mulf %135, %145 : vector<8x128xf32>
      %147 = arith.addf %144, %146 : vector<8x128xf32>
      %148 = math.tanh %147 : vector<8x128xf32>
      %149 = arith.subf %108, %148 : vector<8x128xf32>
      %150 = arith.mulf %143, %149 : vector<8x128xf32>
      %151 = arith.addf %148, %150 : vector<8x128xf32>
      %152 = vector.extract_strided_slice %122 {offsets = [0, 384], sizes = [8, 128], strides = [1, 1]} : vector<8x512xf32> to vector<8x128xf32>
      %153 = arith.index_cast %120 : i32 to index
      %c0_64 = arith.constant 0 : index
      %154 = vector.load %arg1[%153, %c0_64] : memref<64x128xf32, #tpu.memory_space<vmem>>, vector<8x128xf32>
      %155 = arith.subf %151, %154 : vector<8x128xf32>
      %156 = arith.mulf %152, %155 : vector<8x128xf32>
      %157 = arith.addf %156, %154 : vector<8x128xf32>
      %158 = arith.index_cast %120 : i32 to index
      %c0_65 = arith.constant 0 : index
      %159 = vector.load %arg12[%158, %c0_65] : memref<64x512xf32, #tpu.memory_space<vmem>>, vector<8x128xf32>
      tpu.vector_store %arg12[%158, %c0_65], %157 {strides = array<i32>} : memref<64x512xf32, #tpu.memory_space<vmem>>, vector<8x128xf32>,
      %c4_i32_66 = arith.constant 4 : i32
      %160 = arith.muli %arg13, %c4_i32_66 : i32
      %c3_i32 = arith.constant 3 : i32
      %161 = arith.addi %160, %c3_i32 : i32
      %c8_i32_67 = arith.constant 8 : i32
      %162 = arith.muli %161, %c8_i32_67 : i32
      %163 = tpu.assume_multiple %162, 8 : i32
      %164 = arith.index_cast %163 : i32 to index
      %c0_68 = arith.constant 0 : index
      %165 = vector.load %arg12[%164, %c0_68] : memref<64x512xf32, #tpu.memory_space<vmem>>, vector<8x512xf32>
      %c0_69 = arith.constant 0 : index
      %c0_70 = arith.constant 0 : index
      %166 = vector.load %arg5[%c0_69, %c0_70] : memref<128x384xf32, #tpu.memory_space<vmem>>, vector<128x384xf32>
      %cst_71 = arith.constant dense<0.000000e+00> : vector<8x384xf32>
      %167 = tpu.matmul %151, %166, %cst_71 {dimension_numbers = #tpu.dot_dimension_numbers<[1], [0], [0], [1], [0, 0, 1, 1], [], []>} : vector<8x128xf32>, vector<128x384xf32>, vector<8x384xf32> -> vector<8x384xf32>
      %c0_72 = arith.constant 0 : index
      %c0_73 = arith.constant 0 : index
      %168 = vector.load %arg6[%c0_72, %c0_73] : memref<1x384xf32, #tpu.memory_space<vmem>>, vector<1x384xf32>
      %169 = vector.broadcast %168 : vector<1x384xf32> to vector<8x384xf32>
      %170 = arith.addf %167, %169 : vector<8x384xf32>
      %171 = vector.extract_strided_slice %165 {offsets = [0, 0], sizes = [8, 128], strides = [1, 1]} : vector<8x512xf32> to vector<8x128xf32>
      %172 = vector.extract_strided_slice %170 {offsets = [0, 0], sizes = [8, 128], strides = [1, 1]} : vector<8x384xf32> to vector<8x128xf32>
      %173 = arith.addf %171, %172 : vector<8x128xf32>
      %174 = arith.negf %173 : vector<8x128xf32>
      %175 = math.exp %174 : vector<8x128xf32>
      %cst_74 = arith.constant 1.000000e+00 : f32
      %176 = vector.broadcast %cst_74 : f32 to vector<8x128xf32>
      %177 = arith.addf %176, %175 : vector<8x128xf32>
      %178 = arith.divf %176, %177 : vector<8x128xf32>
      %179 = vector.extract_strided_slice %165 {offsets = [0, 128], sizes = [8, 128], strides = [1, 1]} : vector<8x512xf32> to vector<8x128xf32>
      %180 = vector.extract_strided_slice %170 {offsets = [0, 128], sizes = [8, 128], strides = [1, 1]} : vector<8x384xf32> to vector<8x128xf32>
      %181 = arith.addf %179, %180 : vector<8x128xf32>
      %182 = arith.negf %181 : vector<8x128xf32>
      %183 = math.exp %182 : vector<8x128xf32>
      %cst_75 = arith.constant 1.000000e+00 : f32
      %184 = vector.broadcast %cst_75 : f32 to vector<8x128xf32>
      %185 = arith.addf %184, %183 : vector<8x128xf32>
      %186 = arith.divf %184, %185 : vector<8x128xf32>
      %187 = vector.extract_strided_slice %165 {offsets = [0, 256], sizes = [8, 128], strides = [1, 1]} : vector<8x512xf32> to vector<8x128xf32>
      %188 = vector.extract_strided_slice %170 {offsets = [0, 256], sizes = [8, 128], strides = [1, 1]} : vector<8x384xf32> to vector<8x128xf32>
      %189 = arith.mulf %178, %188 : vector<8x128xf32>
      %190 = arith.addf %187, %189 : vector<8x128xf32>
      %191 = math.tanh %190 : vector<8x128xf32>
      %192 = arith.subf %151, %191 : vector<8x128xf32>
      %193 = arith.mulf %186, %192 : vector<8x128xf32>
      %194 = arith.addf %191, %193 : vector<8x128xf32>
      %195 = vector.extract_strided_slice %165 {offsets = [0, 384], sizes = [8, 128], strides = [1, 1]} : vector<8x512xf32> to vector<8x128xf32>
      %196 = arith.index_cast %163 : i32 to index
      %c0_76 = arith.constant 0 : index
      %197 = vector.load %arg1[%196, %c0_76] : memref<64x128xf32, #tpu.memory_space<vmem>>, vector<8x128xf32>
      %198 = arith.subf %194, %197 : vector<8x128xf32>
      %199 = arith.mulf %195, %198 : vector<8x128xf32>
      %200 = arith.addf %199, %197 : vector<8x128xf32>
      %201 = arith.index_cast %163 : i32 to index
      %c0_77 = arith.constant 0 : index
      %202 = vector.load %arg12[%201, %c0_77] : memref<64x512xf32, #tpu.memory_space<vmem>>, vector<8x128xf32>
      tpu.vector_store %arg12[%201, %c0_77], %200 {strides = array<i32>} : memref<64x512xf32, #tpu.memory_space<vmem>>, vector<8x128xf32>,
      scf.yield %194 : vector<8x128xf32>
    }
    %c2_i32_15 = arith.constant 2 : i32
    %c0_16 = arith.constant 0 : index
    %c0_17 = arith.constant 0 : index
    %20 = vector.load %arg11[%c0_16, %c0_17] : memref<8x128xf32, #tpu.memory_space<vmem>>, vector<8x128xf32>
    tpu.vector_store %arg11[%c0_16, %c0_17], %19 {strides = array<i32>} : memref<8x128xf32, #tpu.memory_space<vmem>>, vector<8x128xf32>,
    %c0_18 = arith.constant 0 : index
    %c0_19 = arith.constant 0 : index
    %21 = vector.load %arg12[%c0_18, %c0_19] : memref<64x512xf32, #tpu.memory_space<vmem>>, vector<64x128xf32>
    %c0_20 = arith.constant 0 : index
    %c0_21 = arith.constant 0 : index
    %22 = vector.load %arg7[%c0_20, %c0_21] : memref<128x128xf32, #tpu.memory_space<vmem>>, vector<128x128xf32>
    %cst_22 = arith.constant dense<0.000000e+00> : vector<64x128xf32>
    %23 = tpu.matmul %21, %22, %cst_22 {dimension_numbers = #tpu.dot_dimension_numbers<[1], [0], [0], [1], [0, 0, 1, 1], [], []>} : vector<64x128xf32>, vector<128x128xf32>, vector<64x128xf32> -> vector<64x128xf32>
    %c0_23 = arith.constant 0 : index
    %c0_24 = arith.constant 0 : index
    %24 = vector.load %arg8[%c0_23, %c0_24] : memref<1x128xf32, #tpu.memory_space<vmem>>, vector<1x128xf32>
    %25 = vector.broadcast %24 : vector<1x128xf32> to vector<64x128xf32>
    %26 = arith.addf %23, %25 : vector<64x128xf32>
    %c0_25 = arith.constant 0 : index
    %c0_26 = arith.constant 0 : index
    %27 = vector.load %arg9[%c0_25, %c0_26] : memref<64x128xf32, #tpu.memory_space<vmem>>, vector<64x128xf32>
    tpu.vector_store %arg9[%c0_25, %c0_26], %26 {strides = array<i32>} : memref<64x128xf32, #tpu.memory_space<vmem>>, vector<64x128xf32>,
    %c0_i32_27 = arith.constant 0 : i32
    %28 = arith.cmpi eq, %arg0, %c0_i32_27 : i32
    %29 = arith.extui %28 : i1 to i32
    %c0_i32_28 = arith.constant 0 : i32
    %30 = arith.cmpi ne, %29, %c0_i32_28 : i32
    scf.if %30 {
      %c0_29 = arith.constant 0 : index
      %c0_30 = arith.constant 0 : index
      %31 = vector.load %arg10[%c0_29, %c0_30] : memref<8x128xf32, #tpu.memory_space<vmem>>, vector<8x128xf32>
      tpu.vector_store %arg10[%c0_29, %c0_30], %19 {strides = array<i32>} : memref<8x128xf32, #tpu.memory_space<vmem>>, vector<8x128xf32>,
    } else {
    }
    return
  }
  func.func @transform_0(%arg0: i32) -> (i32, i32) {
    %c0_i32 = arith.constant 0 : i32
    %c0_i32_0 = arith.constant 0 : i32
    return %arg0, %c0_i32 : i32, i32
  }
  func.func @transform_1(%arg0: i32) -> (i32, i32) {
    %c0_i32 = arith.constant 0 : i32
    %c0_i32_0 = arith.constant 0 : i32
    %c0_i32_1 = arith.constant 0 : i32
    return %c0_i32, %c0_i32_0 : i32, i32
  }
  func.func @transform_2(%arg0: i32) -> (i32, i32) {
    %c0_i32 = arith.constant 0 : i32
    %c0_i32_0 = arith.constant 0 : i32
    %c0_i32_1 = arith.constant 0 : i32
    return %c0_i32, %c0_i32_0 : i32, i32
  }
  func.func @transform_3(%arg0: i32) -> (i32, i32) {
    %c0_i32 = arith.constant 0 : i32
    %c0_i32_0 = arith.constant 0 : i32
    %c0_i32_1 = arith.constant 0 : i32
    return %c0_i32, %c0_i32_0 : i32, i32
  }
  func.func @transform_4(%arg0: i32) -> (i32, i32) {
    %c0_i32 = arith.constant 0 : i32
    %c0_i32_0 = arith.constant 0 : i32
    %c0_i32_1 = arith.constant 0 : i32
    return %c0_i32, %c0_i32_0 : i32, i32
  }
  func.func @transform_5(%arg0: i32) -> (i32, i32) {
    %c0_i32 = arith.constant 0 : i32
    %c0_i32_0 = arith.constant 0 : i32
    %c0_i32_1 = arith.constant 0 : i32
    return %c0_i32, %c0_i32_0 : i32, i32
  }
  func.func @transform_6(%arg0: i32) -> (i32, i32) {
    %c0_i32 = arith.constant 0 : i32
    %c0_i32_0 = arith.constant 0 : i32
    %c0_i32_1 = arith.constant 0 : i32
    return %c0_i32, %c0_i32_0 : i32, i32
  }
  func.func @transform_7(%arg0: i32) -> (i32, i32) {
    %c0_i32 = arith.constant 0 : i32
    %c0_i32_0 = arith.constant 0 : i32
    %c0_i32_1 = arith.constant 0 : i32
    return %c0_i32, %c0_i32_0 : i32, i32
  }
  func.func @transform_8(%arg0: i32) -> (i32, i32) {
    %c0_i32 = arith.constant 0 : i32
    %c0_i32_0 = arith.constant 0 : i32
    return %arg0, %c0_i32 : i32, i32
  }
  func.func @transform_9(%arg0: i32) -> (i32, i32) {
    %c0_i32 = arith.constant 0 : i32
    %c0_i32_0 = arith.constant 0 : i32
    %c0_i32_1 = arith.constant 0 : i32
    return %c0_i32, %c0_i32_0 : i32, i32
  }
}

</mosaic_0001>

<llo_original>
// kernel: tpu_custom_call.1
$region0: #{tpu_custom_call.1}
  #allocation0 [shape = 'u32[]', space=smem, size = 0x4, offset = 0x4, fixed_abs, tag = 'smem constant byte address 0x4 - core index']
  #allocation1 [shape = 'u32[72,128]{1,0:T(1,128)}', space=vmem, size = 0x9000, scoped, tag = 'internal scratch']
  #allocation2 [shape = 'f32[8,128]{1,0:T(8,128)}', space=vmem, size = 0x1000, scoped, tag = 'scratch operand']
  #allocation3 [shape = 'f32[64,512]{1,0:T(8,128)}', space=vmem, size = 0x20000, scoped, tag = 'scratch operand']
  %s0 = inlined_call_operand.hbm [shape: f32[64,128], index: 0, kind: input, shape index: {}]
  %s1 = inlined_call_operand.hbm [shape: f32[8,128], index: 1, kind: input, shape index: {}]
  %s2 = inlined_call_operand.hbm [shape: f32[128,512], index: 2, kind: input, shape index: {}]
  %s3 = inlined_call_operand.hbm [shape: f32[1,512], index: 3, kind: input, shape index: {}]
  %s4 = inlined_call_operand.hbm [shape: f32[128,384], index: 4, kind: input, shape index: {}]
  %s5 = inlined_call_operand.vmem [shape: f32[1,384], index: 5, kind: input, shape index: {}]
  %s6 = inlined_call_operand.hbm [shape: f32[128,128], index: 6, kind: input, shape index: {}]
  %s7 = inlined_call_operand.vmem [shape: f32[1,128], index: 7, kind: input, shape index: {}]
  %s8 = inlined_call_operand.hbm [shape: f32[64,128], index: 8, kind: output, shape index: {0}]
  %s9 = inlined_call_operand.hbm [shape: f32[8,128], index: 9, kind: output, shape index: {1}]
  %10 = xla_tuple %s8, %s9
  %s11 = sld [smem:[#allocation0]]
  $region89: #{tpu_custom_call.1} parent=0
    _
  %s13 = ssub.s32 1, %s11
  %s14 = scalar_select 0, %s13, %s11
  $region1: #{tpu_custom_call.1} parent=0
    #allocation4 [shape = 'u8[32768]{0}', space=vmem, size = 0x8000, scoped, tag = 'input window, operand 0, single buffered']
    #allocation5 [shape = 's32[1]{0}', space=sflag, size = 0x4, scoped, tag = 'scoped memory for tpu_custom_call.1']
    #allocation6 [shape = 's32[1]{0}', space=sflag, size = 0x4, scoped, tag = 'scoped memory for tpu_custom_call.1']
    #allocation7 [shape = 'u8[4096]{0}', space=vmem, size = 0x1000, scoped, tag = 'input window, operand 1, single buffered']
    #allocation8 [shape = 's32[1]{0}', space=sflag, size = 0x4, scoped, tag = 'scoped memory for tpu_custom_call.1']
    #allocation9 [shape = 'u8[262144]{0}', space=vmem, size = 0x40000, scoped, tag = 'input window, operand 2, single buffered']
    #allocation10 [shape = 'u8[2048]{0}', space=vmem, size = 0x800, scoped, tag = 'input window, operand 3, single buffered']
    #allocation11 [shape = 's32[1]{0}', space=sflag, size = 0x4, scoped, tag = 'scoped memory for tpu_custom_call.1']
    #allocation12 [shape = 'u8[196608]{0}', space=vmem, size = 0x30000, scoped, tag = 'input window, operand 4, single buffered']
    #allocation13 [shape = 'u8[65536]{0}', space=vmem, size = 0x10000, scoped, tag = 'input window, operand 6, single buffered']
    #allocation14 [shape = 's32[1]{0}', space=sflag, size = 0x4, scoped, tag = 'scoped memory for tpu_custom_call.1']
    #allocation15 [shape = 'u8[32768]{0}', space=vmem, size = 0x8000, scoped, tag = 'output window, operand 0, single buffered']
    #allocation16 [shape = 'u8[4096]{0}', space=vmem, size = 0x1000, scoped, tag = 'output window, operand 1, single buffered']
    #allocation17 [shape = 's32[1]{0}', space=sflag, size = 0x4, scoped, tag = 'scoped memory for tpu_custom_call.1']
    %15 = vsyncpa [#allocation5], 0
    %16 = vsyncpa [#allocation8], 0
    %17 = vsyncpa [#allocation11], 0
    %18 = vsyncpa [#allocation14], 0
    %19 = vsyncpa [#allocation6], 0
    %20 = vsyncpa [#allocation17], 0
    // Predicated region
    $region2: #{tpu_custom_call.1} parent=1 // pred_check
      _
    $region3: #{tpu_custom_call.1} parent=1 // pred_check_branch
      %22 = sbr.rel (0) target = $region5
    $region4: #{tpu_custom_call.1} parent=1 // pred_region
      %24 = vsyncadd [#allocation5], 0
      %s25 = sshll.u32 %s0, 4
      %s26 = int_to_ptr.hbm [resolvable:$true] %s25
      %s27 = sshll.u32 [#allocation4], 4
      %s28 = int_to_ptr.vmem [resolvable:$true] %s27
      %33 = dma.hbm_to_vmem [thread:$0]  %s26, 1024, %s28, [#allocation5], 128, 128, 8
    $region5: #{tpu_custom_call.1} parent=1 // pred_fallthru
      _
    // Predicated region
    $region6: #{tpu_custom_call.1} parent=1 // pred_check
      _
    $region7: #{tpu_custom_call.1} parent=1 // pred_check_branch
      %35 = sbr.rel (0) target = $region9
    $region8: #{tpu_custom_call.1} parent=1 // pred_region
      %37 = vsyncadd [#allocation8], 0
      %s39 = sshll.u32 %s1, 4
      %s40 = int_to_ptr.hbm [resolvable:$true] %s39
      %s41 = sshll.u32 [#allocation7], 4
      %s42 = int_to_ptr.vmem [resolvable:$true] %s41
      %44 = dma.hbm_to_vmem [thread:$0]  %s40, 128, %s42, [#allocation8]
    $region9: #{tpu_custom_call.1} parent=1 // pred_fallthru
      _
    // Predicated region
    $region10: #{tpu_custom_call.1} parent=1 // pred_check
      _
    $region11: #{tpu_custom_call.1} parent=1 // pred_check_branch
      %46 = sbr.rel (0) target = $region13
    $region12: #{tpu_custom_call.1} parent=1 // pred_region
      %48 = vsyncadd [#allocation8], 0
      %s49 = sshll.u32 %s2, 4
      %s50 = int_to_ptr.hbm [resolvable:$true] %s49
      %s51 = sshll.u32 [#allocation9], 4
      %s52 = int_to_ptr.vmem [resolvable:$true] %s51
      %57 = dma.hbm_to_vmem [thread:$0]  %s50, 8192, %s52, [#allocation8], 512, 512, 32
    $region13: #{tpu_custom_call.1} parent=1 // pred_fallthru
      _
    // Predicated region
    $region14: #{tpu_custom_call.1} parent=1 // pred_check
      _
    $region15: #{tpu_custom_call.1} parent=1 // pred_check_branch
      %59 = sbr.rel (0) target = $region17
    $region16: #{tpu_custom_call.1} parent=1 // pred_region
      %61 = vsyncadd [#allocation11], 0
      %s63 = sshll.u32 %s3, 4
      %s64 = int_to_ptr.hbm [resolvable:$true] %s63
      %s65 = sshll.u32 [#allocation10], 4
      %s66 = int_to_ptr.vmem [resolvable:$true] %s65
      %68 = dma.hbm_to_vmem [thread:$0]  %s64, 64, %s66, [#allocation11]
    $region17: #{tpu_custom_call.1} parent=1 // pred_fallthru
      _
    // Predicated region
    $region18: #{tpu_custom_call.1} parent=1 // pred_check
      _
    $region19: #{tpu_custom_call.1} parent=1 // pred_check_branch
      %70 = sbr.rel (0) target = $region21
    $region20: #{tpu_custom_call.1} parent=1 // pred_region
      %72 = vsyncadd [#allocation11], 0
      %s73 = sshll.u32 %s4, 4
      %s74 = int_to_ptr.hbm [resolvable:$true] %s73
      %s75 = sshll.u32 [#allocation12], 4
      %s76 = int_to_ptr.vmem [resolvable:$true] %s75
      %81 = dma.hbm_to_vmem [thread:$0]  %s74, 6144, %s76, [#allocation11], 384, 384, 24
    $region21: #{tpu_custom_call.1} parent=1 // pred_fallthru
      _
    // Predicated region
    $region22: #{tpu_custom_call.1} parent=1 // pred_check
      _
    $region23: #{tpu_custom_call.1} parent=1 // pred_check_branch
      %83 = sbr.rel (0) target = $region25
    $region24: #{tpu_custom_call.1} parent=1 // pred_region
      _
    $region25: #{tpu_custom_call.1} parent=1 // pred_fallthru
      _
    // Predicated region
    $region26: #{tpu_custom_call.1} parent=1 // pred_check
      _
    $region27: #{tpu_custom_call.1} parent=1 // pred_check_branch
      %85 = sbr.rel (0) target = $region29
    $region28: #{tpu_custom_call.1} parent=1 // pred_region
      %87 = vsyncadd [#allocation14], 0
      %s88 = sshll.u32 %s6, 4
      %s89 = int_to_ptr.hbm [resolvable:$true] %s88
      %s90 = sshll.u32 [#allocation13], 4
      %s91 = int_to_ptr.vmem [resolvable:$true] %s90
      %96 = dma.hbm_to_vmem [thread:$0]  %s89, 2048, %s91, [#allocation14], 128, 128, 8
    $region29: #{tpu_custom_call.1} parent=1 // pred_fallthru
      _
    // Predicated region
    $region30: #{tpu_custom_call.1} parent=1 // pred_check
      _
    $region31: #{tpu_custom_call.1} parent=1 // pred_check_branch
      %98 = sbr.rel (0) target = $region33
    $region32: #{tpu_custom_call.1} parent=1 // pred_region
      _
    $region33: #{tpu_custom_call.1} parent=1 // pred_fallthru
      _
    // Predicated region
    $region34: #{tpu_custom_call.1} parent=1 // pred_check
      _
    $region35: #{tpu_custom_call.1} parent=1 // pred_check_branch
      %100 = sbr.rel (0) target = $region37
    $region36: #{tpu_custom_call.1} parent=1 // pred_region
      %102 = dma.done [#allocation5], 1024
    $region37: #{tpu_custom_call.1} parent=1 // pred_fallthru
      _
    // Predicated region
    $region38: #{tpu_custom_call.1} parent=1 // pred_check
      _
    $region39: #{tpu_custom_call.1} parent=1 // pred_check_branch
      %104 = sbr.rel (0) target = $region41
    $region40: #{tpu_custom_call.1} parent=1 // pred_region
      %106 = dma.done [#allocation8], 128
    $region41: #{tpu_custom_call.1} parent=1 // pred_fallthru
      _
    // Predicated region
    $region42: #{tpu_custom_call.1} parent=1 // pred_check
      _
    $region43: #{tpu_custom_call.1} parent=1 // pred_check_branch
      %108 = sbr.rel (0) target = $region45
    $region44: #{tpu_custom_call.1} parent=1 // pred_region
      %110 = dma.done [#allocation8], 8192
    $region45: #{tpu_custom_call.1} parent=1 // pred_fallthru
      _
    // Predicated region
    $region46: #{tpu_custom_call.1} parent=1 // pred_check
      _
    $region47: #{tpu_custom_call.1} parent=1 // pred_check_branch
      %112 = sbr.rel (0) target = $region49
    $region48: #{tpu_custom_call.1} parent=1 // pred_region
      %114 = dma.done [#allocation11], 64
    $region49: #{tpu_custom_call.1} parent=1 // pred_fallthru
      _
    // Predicated region
    $region50: #{tpu_custom_call.1} parent=1 // pred_check
      _
    $region51: #{tpu_custom_call.1} parent=1 // pred_check_branch
      %116 = sbr.rel (0) target = $region53
    $region52: #{tpu_custom_call.1} parent=1 // pred_region
      %118 = dma.done [#allocation11], 6144
    $region53: #{tpu_custom_call.1} parent=1 // pred_fallthru
      _
    // Predicated region
    $region54: #{tpu_custom_call.1} parent=1 // pred_check
      _
    $region55: #{tpu_custom_call.1} parent=1 // pred_check_branch
      %120 = sbr.rel (0) target = $region57
    $region56: #{tpu_custom_call.1} parent=1 // pred_region
      %122 = dma.done [#allocation14], 2048
    $region57: #{tpu_custom_call.1} parent=1 // pred_fallthru
      _
    %p123 = scmp.eq.s32.totalorder 0, 0
    // Predicated region
    $region58: #{tpu_custom_call.1} parent=1 // pred_check
      %p124 = pneg %p123
    $region59: #{tpu_custom_call.1} parent=1 // pred_check_branch
      %126 = sbr.rel (%p124) target = $region61
    $region60: #{tpu_custom_call.1} parent=1 // pred_region
      %v127 = vld [vmem:[#allocation7] sm:$0xff]
      %128 = vst [vmem:[#allocation2] sm:$0xff] %v127
    $region61: #{tpu_custom_call.1} parent=1 // pred_fallthru
      _
    %v129 = vld [vmem:[#allocation4] sm:$0xff]
    %v130 = vld [vmem:[#allocation4 + $0x8] sm:$0xff]
    %v131 = vld [vmem:[#allocation4 + $0x10] sm:$0xff]
    %v132 = vld [vmem:[#allocation4 + $0x18] sm:$0xff]
    %v133 = vld [vmem:[#allocation4 + $0x20] sm:$0xff]
    %v134 = vld [vmem:[#allocation4 + $0x28] sm:$0xff]
    %v135 = vld [vmem:[#allocation4 + $0x30] sm:$0xff]
    %v136 = vld [vmem:[#allocation4 + $0x38] sm:$0xff]
    %v137 = vld [vmem:[#allocation9] sm:$0xff]
    %v138 = vld [vmem:[#allocation9 + $0x8] sm:$0xff]
    %v139 = vld [vmem:[#allocation9 + $0x10] sm:$0xff]
    %v140 = vld [vmem:[#allocation9 + $0x18] sm:$0xff]
    %v141 = vld [vmem:[#allocation9 + $0x20] sm:$0xff]
    %v142 = vld [vmem:[#allocation9 + $0x28] sm:$0xff]
    %v143 = vld [vmem:[#allocation9 + $0x30] sm:$0xff]
    %v144 = vld [vmem:[#allocation9 + $0x38] sm:$0xff]
    %v145 = vld [vmem:[#allocation9 + $0x40] sm:$0xff]
    %v146 = vld [vmem:[#allocation9 + $0x48] sm:$0xff]
    %v147 = vld [vmem:[#allocation9 + $0x50] sm:$0xff]
    %v148 = vld [vmem:[#allocation9 + $0x58] sm:$0xff]
    %v149 = vld [vmem:[#allocation9 + $0x60] sm:$0xff]
    %v150 = vld [vmem:[#allocation9 + $0x68] sm:$0xff]
    %v151 = vld [vmem:[#allocation9 + $0x70] sm:$0xff]
    %v152 = vld [vmem:[#allocation9 + $0x78] sm:$0xff]
    %v153 = vld [vmem:[#allocation9 + $0x80] sm:$0xff]
    %v154 = vld [vmem:[#allocation9 + $0x88] sm:$0xff]
    %v155 = vld [vmem:[#allocation9 + $0x90] sm:$0xff]
    %v156 = vld [vmem:[#allocation9 + $0x98] sm:$0xff]
    %v157 = vld [vmem:[#allocation9 + $0xa0] sm:$0xff]
    %v158 = vld [vmem:[#allocation9 + $0xa8] sm:$0xff]
    %v159 = vld [vmem:[#allocation9 + $0xb0] sm:$0xff]
    %v160 = vld [vmem:[#allocation9 + $0xb8] sm:$0xff]
    %v161 = vld [vmem:[#allocation9 + $0xc0] sm:$0xff]
    %v162 = vld [vmem:[#allocation9 + $0xc8] sm:$0xff]
    %v163 = vld [vmem:[#allocation9 + $0xd0] sm:$0xff]
    %v164 = vld [vmem:[#allocation9 + $0xd8] sm:$0xff]
    %v165 = vld [vmem:[#allocation9 + $0xe0] sm:$0xff]
    %v166 = vld [vmem:[#allocation9 + $0xe8] sm:$0xff]
    %v167 = vld [vmem:[#allocation9 + $0xf0] sm:$0xff]
    %v168 = vld [vmem:[#allocation9 + $0xf8] sm:$0xff]
    %v169 = vld [vmem:[#allocation9 + $0x100] sm:$0xff]
    %v170 = vld [vmem:[#allocation9 + $0x108] sm:$0xff]
    %v171 = vld [vmem:[#allocation9 + $0x110] sm:$0xff]
    %v172 = vld [vmem:[#allocation9 + $0x118] sm:$0xff]
    %v173 = vld [vmem:[#allocation9 + $0x120] sm:$0xff]
    %v174 = vld [vmem:[#allocation9 + $0x128] sm:$0xff]
    %v175 = vld [vmem:[#allocation9 + $0x130] sm:$0xff]
    %v176 = vld [vmem:[#allocation9 + $0x138] sm:$0xff]
    %v177 = vld [vmem:[#allocation9 + $0x140] sm:$0xff]
    %v178 = vld [vmem:[#allocation9 + $0x148] sm:$0xff]
    %v179 = vld [vmem:[#allocation9 + $0x150] sm:$0xff]
    %v180 = vld [vmem:[#allocation9 + $0x158] sm:$0xff]
    %v181 = vld [vmem:[#allocation9 + $0x160] sm:$0xff]
    %v182 = vld [vmem:[#allocation9 + $0x168] sm:$0xff]
    %v183 = vld [vmem:[#allocation9 + $0x170] sm:$0xff]
    %v184 = vld [vmem:[#allocation9 + $0x178] sm:$0xff]
    %v185 = vld [vmem:[#allocation9 + $0x180] sm:$0xff]
    %v186 = vld [vmem:[#allocation9 + $0x188] sm:$0xff]
    %v187 = vld [vmem:[#allocation9 + $0x190] sm:$0xff]
    %v188 = vld [vmem:[#allocation9 + $0x198] sm:$0xff]
    %v189 = vld [vmem:[#allocation9 + $0x1a0] sm:$0xff]
    %v190 = vld [vmem:[#allocation9 + $0x1a8] sm:$0xff]
    %v191 = vld [vmem:[#allocation9 + $0x1b0] sm:$0xff]
    %v192 = vld [vmem:[#allocation9 + $0x1b8] sm:$0xff]
    %v193 = vld [vmem:[#allocation9 + $0x1c0] sm:$0xff]
    %v194 = vld [vmem:[#allocation9 + $0x1c8] sm:$0xff]
    %v195 = vld [vmem:[#allocation9 + $0x1d0] sm:$0xff]
    %v196 = vld [vmem:[#allocation9 + $0x1d8] sm:$0xff]
    %v197 = vld [vmem:[#allocation9 + $0x1e0] sm:$0xff]
    %v198 = vld [vmem:[#allocation9 + $0x1e8] sm:$0xff]
    %v199 = vld [vmem:[#allocation9 + $0x1f0] sm:$0xff]
    %v200 = vld [vmem:[#allocation9 + $0x1f8] sm:$0xff]
    %v201 = vld [vmem:[#allocation10] sm:$0xf]
    %v203 = vperm.slane %v201, 0
    %v204 = vperm.slane %v201, 1
    %v205 = vperm.slane %v201, 2
    %v206 = vperm.slane %v201, 3
    %211 = vmatpush.msra.mxu0 %v197
    %212 = vmatpush.msra.mxu0 %v193
    %213 = vmatpush.msra.mxu0 %v189
    %214 = vmatpush.msra.mxu0 %v185
    %215 = vmatpush.msra.mxu0 %v181
    %216 = vmatpush.msra.mxu0 %v177
    %217 = vmatpush.msra.mxu0 %v173
    %218 = vmatpush.msra.mxu0 %v169
    %219 = vmatpush.msra.mxu0 %v165
    %220 = vmatpush.msra.mxu0 %v161
    %221 = vmatpush.msra.mxu0 %v157
    %222 = vmatpush.msra.mxu0 %v153
    %223 = vmatpush.msra.mxu0 %v149
    %224 = vmatpush.msra.mxu0 %v145
    %225 = vmatpush.msra.mxu0 %v141
    %226 = vmatpush.msra.mxu0 %v137
    %227 = vmatmul.f32.gmra.mxu0 %v129
    %v228 = vpop.f32.mrf.mxu0
    %v229 = vadd.f32 %v203, %v228
    %230 = vmatmul.f32.gmra.mxu0 %v130
    %v231 = vpop.f32.mrf.mxu0
    %v232 = vadd.f32 %v203, %v231
    %233 = vmatmul.f32.gmra.mxu0 %v131
    %v234 = vpop.f32.mrf.mxu0
    %v235 = vadd.f32 %v203, %v234
    %236 = vmatmul.f32.gmra.mxu0 %v132
    %v237 = vpop.f32.mrf.mxu0
    %v238 = vadd.f32 %v203, %v237
    %239 = vmatmul.f32.gmra.mxu0 %v133
    %v240 = vpop.f32.mrf.mxu0
    %v241 = vadd.f32 %v203, %v240
    %242 = vmatmul.f32.gmra.mxu0 %v134
    %v243 = vpop.f32.mrf.mxu0
    %v244 = vadd.f32 %v203, %v243
    %245 = vmatmul.f32.gmra.mxu0 %v135
    %v246 = vpop.f32.mrf.mxu0
    %v247 = vadd.f32 %v203, %v246
    %248 = vmatmul.f32.gmra.mxu0 %v136
    %v249 = vpop.f32.mrf.mxu0
    %v250 = vadd.f32 %v203, %v249
    %251 = vdwg.mxu0
    %252 = vmatpush.msra.mxu0 %v198
    %253 = vmatpush.msra.mxu0 %v194
    %254 = vmatpush.msra.mxu0 %v190
    %255 = vmatpush.msra.mxu0 %v186
    %256 = vmatpush.msra.mxu0 %v182
    %257 = vmatpush.msra.mxu0 %v178
    %258 = vmatpush.msra.mxu0 %v174
    %259 = vmatpush.msra.mxu0 %v170
    %260 = vmatpush.msra.mxu0 %v166
    %261 = vmatpush.msra.mxu0 %v162
    %262 = vmatpush.msra.mxu0 %v158
    %263 = vmatpush.msra.mxu0 %v154
    %264 = vmatpush.msra.mxu0 %v150
    %265 = vmatpush.msra.mxu0 %v146
    %266 = vmatpush.msra.mxu0 %v142
    %267 = vmatpush.msra.mxu0 %v138
    %268 = vmatmul.f32.gmra.mxu0 %v129
    %v269 = vpop.f32.mrf.mxu0
    %v270 = vadd.f32 %v204, %v269
    %271 = vmatmul.f32.gmra.mxu0 %v130
    %v272 = vpop.f32.mrf.mxu0
    %v273 = vadd.f32 %v204, %v272
    %274 = vmatmul.f32.gmra.mxu0 %v131
    %v275 = vpop.f32.mrf.mxu0
    %v276 = vadd.f32 %v204, %v275
    %277 = vmatmul.f32.gmra.mxu0 %v132
    %v278 = vpop.f32.mrf.mxu0
    %v279 = vadd.f32 %v204, %v278
    %280 = vmatmul.f32.gmra.mxu0 %v133
    %v281 = vpop.f32.mrf.mxu0
    %v282 = vadd.f32 %v204, %v281
    %283 = vmatmul.f32.gmra.mxu0 %v134
    %v284 = vpop.f32.mrf.mxu0
    %v285 = vadd.f32 %v204, %v284
    %286 = vmatmul.f32.gmra.mxu0 %v135
    %v287 = vpop.f32.mrf.mxu0
    %v288 = vadd.f32 %v204, %v287
    %289 = vmatmul.f32.gmra.mxu0 %v136
    %v290 = vpop.f32.mrf.mxu0
    %v291 = vadd.f32 %v204, %v290
    %292 = vdwg.mxu0
    %293 = vmatpush.msra.mxu0 %v199
    %294 = vmatpush.msra.mxu0 %v195
    %295 = vmatpush.msra.mxu0 %v191
    %296 = vmatpush.msra.mxu0 %v187
    %297 = vmatpush.msra.mxu0 %v183
    %298 = vmatpush.msra.mxu0 %v179
    %299 = vmatpush.msra.mxu0 %v175
    %300 = vmatpush.msra.mxu0 %v171
    %301 = vmatpush.msra.mxu0 %v167
    %302 = vmatpush.msra.mxu0 %v163
    %303 = vmatpush.msra.mxu0 %v159
    %304 = vmatpush.msra.mxu0 %v155
    %305 = vmatpush.msra.mxu0 %v151
    %306 = vmatpush.msra.mxu0 %v147
    %307 = vmatpush.msra.mxu0 %v143
    %308 = vmatpush.msra.mxu0 %v139
    %309 = vmatmul.f32.gmra.mxu0 %v129
    %v310 = vpop.f32.mrf.mxu0
    %v311 = vadd.f32 %v205, %v310
    %312 = vmatmul.f32.gmra.mxu0 %v130
    %v313 = vpop.f32.mrf.mxu0
    %v314 = vadd.f32 %v205, %v313
    %315 = vmatmul.f32.gmra.mxu0 %v131
    %v316 = vpop.f32.mrf.mxu0
    %v317 = vadd.f32 %v205, %v316
    %318 = vmatmul.f32.gmra.mxu0 %v132
    %v319 = vpop.f32.mrf.mxu0
    %v320 = vadd.f32 %v205, %v319
    %321 = vmatmul.f32.gmra.mxu0 %v133
    %v322 = vpop.f32.mrf.mxu0
    %v323 = vadd.f32 %v205, %v322
    %324 = vmatmul.f32.gmra.mxu0 %v134
    %v325 = vpop.f32.mrf.mxu0
    %v326 = vadd.f32 %v205, %v325
    %327 = vmatmul.f32.gmra.mxu0 %v135
    %v328 = vpop.f32.mrf.mxu0
    %v329 = vadd.f32 %v205, %v328
    %330 = vmatmul.f32.gmra.mxu0 %v136
    %v331 = vpop.f32.mrf.mxu0
    %v332 = vadd.f32 %v205, %v331
    %333 = vdwg.mxu0
    %334 = vmatpush.msra.mxu0 %v200
    %335 = vmatpush.msra.mxu0 %v196
    %336 = vmatpush.msra.mxu0 %v192
    %337 = vmatpush.msra.mxu0 %v188
    %338 = vmatpush.msra.mxu0 %v184
    %339 = vmatpush.msra.mxu0 %v180
    %340 = vmatpush.msra.mxu0 %v176
    %341 = vmatpush.msra.mxu0 %v172
    %342 = vmatpush.msra.mxu0 %v168
    %343 = vmatpush.msra.mxu0 %v164
    %344 = vmatpush.msra.mxu0 %v160
    %345 = vmatpush.msra.mxu0 %v156
    %346 = vmatpush.msra.mxu0 %v152
    %347 = vmatpush.msra.mxu0 %v148
    %348 = vmatpush.msra.mxu0 %v144
    %349 = vmatpush.msra.mxu0 %v140
    %350 = vmatmul.f32.gmra.mxu0 %v129
    %v351 = vpop.f32.mrf.mxu0
    %v352 = vadd.f32 %v206, %v351
    %353 = vmatmul.f32.gmra.mxu0 %v130
    %v354 = vpop.f32.mrf.mxu0
    %v355 = vadd.f32 %v206, %v354
    %356 = vmatmul.f32.gmra.mxu0 %v131
    %v357 = vpop.f32.mrf.mxu0
    %v358 = vadd.f32 %v206, %v357
    %359 = vmatmul.f32.gmra.mxu0 %v132
    %v360 = vpop.f32.mrf.mxu0
    %v361 = vadd.f32 %v206, %v360
    %362 = vmatmul.f32.gmra.mxu0 %v133
    %v363 = vpop.f32.mrf.mxu0
    %v364 = vadd.f32 %v206, %v363
    %365 = vmatmul.f32.gmra.mxu0 %v134
    %v366 = vpop.f32.mrf.mxu0
    %v367 = vadd.f32 %v206, %v366
    %368 = vmatmul.f32.gmra.mxu0 %v135
    %v369 = vpop.f32.mrf.mxu0
    %v370 = vadd.f32 %v206, %v369
    %371 = vmatmul.f32.gmra.mxu0 %v136
    %v372 = vpop.f32.mrf.mxu0
    %v373 = vadd.f32 %v206, %v372
    %374 = vdwg.mxu0
    %375 = vst [vmem:[#allocation3] sm:$0xff] %v229
    %376 = vst [vmem:[#allocation3 + $0x8] sm:$0xff] %v270
    %377 = vst [vmem:[#allocation3 + $0x10] sm:$0xff] %v311
    %378 = vst [vmem:[#allocation3 + $0x18] sm:$0xff] %v352
    %379 = vst [vmem:[#allocation3 + $0x20] sm:$0xff] %v232
    %380 = vst [vmem:[#allocation3 + $0x28] sm:$0xff] %v273
    %381 = vst [vmem:[#allocation3 + $0x30] sm:$0xff] %v314
    %382 = vst [vmem:[#allocation3 + $0x38] sm:$0xff] %v355
    %383 = vst [vmem:[#allocation3 + $0x40] sm:$0xff] %v235
    %384 = vst [vmem:[#allocation3 + $0x48] sm:$0xff] %v276
    %385 = vst [vmem:[#allocation3 + $0x50] sm:$0xff] %v317
    %386 = vst [vmem:[#allocation3 + $0x58] sm:$0xff] %v358
    %387 = vst [vmem:[#allocation3 + $0x60] sm:$0xff] %v238
    %388 = vst [vmem:[#allocation3 + $0x68] sm:$0xff] %v279
    %389 = vst [vmem:[#allocation3 + $0x70] sm:$0xff] %v320
    %390 = vst [vmem:[#allocation3 + $0x78] sm:$0xff] %v361
    %391 = vst [vmem:[#allocation3 + $0x80] sm:$0xff] %v241
    %392 = vst [vmem:[#allocation3 + $0x88] sm:$0xff] %v282
    %393 = vst [vmem:[#allocation3 + $0x90] sm:$0xff] %v323
    %394 = vst [vmem:[#allocation3 + $0x98] sm:$0xff] %v364
    %395 = vst [vmem:[#allocation3 + $0xa0] sm:$0xff] %v244
    %396 = vst [vmem:[#allocation3 + $0xa8] sm:$0xff] %v285
    %397 = vst [vmem:[#allocation3 + $0xb0] sm:$0xff] %v326
    %398 = vst [vmem:[#allocation3 + $0xb8] sm:$0xff] %v367
    %399 = vst [vmem:[#allocation3 + $0xc0] sm:$0xff] %v247
    %400 = vst [vmem:[#allocation3 + $0xc8] sm:$0xff] %v288
    %401 = vst [vmem:[#allocation3 + $0xd0] sm:$0xff] %v329
    %402 = vst [vmem:[#allocation3 + $0xd8] sm:$0xff] %v370
    %403 = vst [vmem:[#allocation3 + $0xe0] sm:$0xff] %v250
    %404 = vst [vmem:[#allocation3 + $0xe8] sm:$0xff] %v291
    %405 = vst [vmem:[#allocation3 + $0xf0] sm:$0xff] %v332
    %406 = vst [vmem:[#allocation3 + $0xf8] sm:$0xff] %v373
    %v407 = vld [vmem:[#allocation3 + $0x18] sm:$0xff]
    %v408 = vld [vmem:[#allocation3 + $0x38] sm:$0xff]
    %v409 = vld [vmem:[#allocation3 + $0x58] sm:$0xff]
    %v410 = vld [vmem:[#allocation3 + $0x78] sm:$0xff]
    %v411 = vld [vmem:[#allocation3 + $0x98] sm:$0xff]
    %v412 = vld [vmem:[#allocation3 + $0xb8] sm:$0xff]
    %v413 = vld [vmem:[#allocation3 + $0xd8] sm:$0xff]
    %v414 = vld [vmem:[#allocation3 + $0xf8] sm:$0xff]
    %v415 = vxor.u32 %v407, 2147483648
    %v416 = vxor.u32 %v408, 2147483648
    %v417 = vxor.u32 %v409, 2147483648
    %v418 = vxor.u32 %v410, 2147483648
    %v419 = vxor.u32 %v411, 2147483648
    %v420 = vxor.u32 %v412, 2147483648
    %v421 = vxor.u32 %v413, 2147483648
    %v422 = vxor.u32 %v414, 2147483648
    %v423 = vmul.f32 %v415, 1.442695
    %v424 = vpow.pop %v423
    %v425 = vmul.f32 %v416, 1.442695
    %v426 = vpow.pop %v425
    %v427 = vmul.f32 %v417, 1.442695
    %v428 = vpow.pop %v427
    %v429 = vmul.f32 %v418, 1.442695
    %v430 = vpow.pop %v429
    %v431 = vmul.f32 %v419, 1.442695
    %v432 = vpow.pop %v431
    %v433 = vmul.f32 %v420, 1.442695
    %v434 = vpow.pop %v433
    %v435 = vmul.f32 %v421, 1.442695
    %v436 = vpow.pop %v435
    %v437 = vmul.f32 %v422, 1.442695
    %v438 = vpow.pop %v437
    %v439 = vadd.f32 %v424, 1.0
    %v440 = vadd.f32 %v426, 1.0
    %v441 = vadd.f32 %v428, 1.0
    %v442 = vadd.f32 %v430, 1.0
    %v443 = vadd.f32 %v432, 1.0
    %v444 = vadd.f32 %v434, 1.0
    %v445 = vadd.f32 %v436, 1.0
    %v446 = vadd.f32 %v438, 1.0
    %v447 = vrcp.pop %v439
    %v448 = vmul.f32 %v439, %v447
    %v449 = vsub.f32 1.0, %v448
    %v450 = vmul.f32 %v447, %v449
    %v451 = vadd.f32 %v447, %v450
    %vm452 = vweird.f32 %v439
    %vm453 = vweird.f32 %v447
    %vm454 = vmor %vm452, %vm453
    %v455 = vsel %vm454, %v447, %v451
    %v456 = vand.u32 2147483647, %v439
    %vm457 = vcmp.eq.f32.partialorder %v456, 8.507059e+37
    %v458 = vand.u32 %v439, 2147483648
    %v459 = vor.u32 1.1754944e-38, %v458
    %v460 = vsel %vm457, %v459, %v455
    %v461 = vmul.f32 1.0, %v460
    %v462 = vrcp.pop %v440
    %v463 = vmul.f32 %v440, %v462
    %v464 = vsub.f32 1.0, %v463
    %v465 = vmul.f32 %v462, %v464
    %v466 = vadd.f32 %v462, %v465
    %vm467 = vweird.f32 %v440
    %vm468 = vweird.f32 %v462
    %vm469 = vmor %vm467, %vm468
    %v470 = vsel %vm469, %v462, %v466
    %v471 = vand.u32 2147483647, %v440
    %vm472 = vcmp.eq.f32.partialorder %v471, 8.507059e+37
    %v473 = vand.u32 %v440, 2147483648
    %v474 = vor.u32 1.1754944e-38, %v473
    %v475 = vsel %vm472, %v474, %v470
    %v476 = vmul.f32 1.0, %v475
    %v477 = vrcp.pop %v441
    %v478 = vmul.f32 %v441, %v477
    %v479 = vsub.f32 1.0, %v478
    %v480 = vmul.f32 %v477, %v479
    %v481 = vadd.f32 %v477, %v480
    %vm482 = vweird.f32 %v441
    %vm483 = vweird.f32 %v477
    %vm484 = vmor %vm482, %vm483
    %v485 = vsel %vm484, %v477, %v481
    %v486 = vand.u32 2147483647, %v441
    %vm487 = vcmp.eq.f32.partialorder %v486, 8.507059e+37
    %v488 = vand.u32 %v441, 2147483648
    %v489 = vor.u32 1.1754944e-38, %v488
    %v490 = vsel %vm487, %v489, %v485
    %v491 = vmul.f32 1.0, %v490
    %v492 = vrcp.pop %v442
    %v493 = vmul.f32 %v442, %v492
    %v494 = vsub.f32 1.0, %v493
    %v495 = vmul.f32 %v492, %v494
    %v496 = vadd.f32 %v492, %v495
    %vm497 = vweird.f32 %v442
    %vm498 = vweird.f32 %v492
    %vm499 = vmor %vm497, %vm498
    %v500 = vsel %vm499, %v492, %v496
    %v501 = vand.u32 2147483647, %v442
    %vm502 = vcmp.eq.f32.partialorder %v501, 8.507059e+37
    %v503 = vand.u32 %v442, 2147483648
    %v504 = vor.u32 1.1754944e-38, %v503
    %v505 = vsel %vm502, %v504, %v500
    %v506 = vmul.f32 1.0, %v505
    %v507 = vrcp.pop %v443
    %v508 = vmul.f32 %v443, %v507
    %v509 = vsub.f32 1.0, %v508
    %v510 = vmul.f32 %v507, %v509
    %v511 = vadd.f32 %v507, %v510
    %vm512 = vweird.f32 %v443
    %vm513 = vweird.f32 %v507
    %vm514 = vmor %vm512, %vm513
    %v515 = vsel %vm514, %v507, %v511
    %v516 = vand.u32 2147483647, %v443
    %vm517 = vcmp.eq.f32.partialorder %v516, 8.507059e+37
    %v518 = vand.u32 %v443, 2147483648
    %v519 = vor.u32 1.1754944e-38, %v518
    %v520 = vsel %vm517, %v519, %v515
    %v521 = vmul.f32 1.0, %v520
    %v522 = vrcp.pop %v444
    %v523 = vmul.f32 %v444, %v522
    %v524 = vsub.f32 1.0, %v523
    %v525 = vmul.f32 %v522, %v524
    %v526 = vadd.f32 %v522, %v525
    %vm527 = vweird.f32 %v444
    %vm528 = vweird.f32 %v522
    %vm529 = vmor %vm527, %vm528
    %v530 = vsel %vm529, %v522, %v526
    %v531 = vand.u32 2147483647, %v444
    %vm532 = vcmp.eq.f32.partialorder %v531, 8.507059e+37
    %v533 = vand.u32 %v444, 2147483648
    %v534 = vor.u32 1.1754944e-38, %v533
    %v535 = vsel %vm532, %v534, %v530
    %v536 = vmul.f32 1.0, %v535
    %v537 = vrcp.pop %v445
    %v538 = vmul.f32 %v445, %v537
    %v539 = vsub.f32 1.0, %v538
    %v540 = vmul.f32 %v537, %v539
    %v541 = vadd.f32 %v537, %v540
    %vm542 = vweird.f32 %v445
    %vm543 = vweird.f32 %v537
    %vm544 = vmor %vm542, %vm543
    %v545 = vsel %vm544, %v537, %v541
    %v546 = vand.u32 2147483647, %v445
    %vm547 = vcmp.eq.f32.partialorder %v546, 8.507059e+37
    %v548 = vand.u32 %v445, 2147483648
    %v549 = vor.u32 1.1754944e-38, %v548
    %v550 = vsel %vm547, %v549, %v545
    %v551 = vmul.f32 1.0, %v550
    %v552 = vrcp.pop %v446
    %v553 = vmul.f32 %v446, %v552
    %v554 = vsub.f32 1.0, %v553
    %v555 = vmul.f32 %v552, %v554
    %v556 = vadd.f32 %v552, %v555
    %vm557 = vweird.f32 %v446
    %vm558 = vweird.f32 %v552
    %vm559 = vmor %vm557, %vm558
    %v560 = vsel %vm559, %v552, %v556
    %v561 = vand.u32 2147483647, %v446
    %vm562 = vcmp.eq.f32.partialorder %v561, 8.507059e+37
    %v563 = vand.u32 %v446, 2147483648
    %v564 = vor.u32 1.1754944e-38, %v563
    %v565 = vsel %vm562, %v564, %v560
    %v566 = vmul.f32 1.0, %v565
    %567 = vst [vmem:[#allocation3 + $0x18] sm:$0xff] %v461
    %568 = vst [vmem:[#allocation3 + $0x38] sm:$0xff] %v476
    %569 = vst [vmem:[#allocation3 + $0x58] sm:$0xff] %v491
    %570 = vst [vmem:[#allocation3 + $0x78] sm:$0xff] %v506
    %571 = vst [vmem:[#allocation3 + $0x98] sm:$0xff] %v521
    %572 = vst [vmem:[#allocation3 + $0xb8] sm:$0xff] %v536
    %573 = vst [vmem:[#allocation3 + $0xd8] sm:$0xff] %v551
    %574 = vst [vmem:[#allocation3 + $0xf8] sm:$0xff] %v566
    %v575 = vld [vmem:[#allocation2] sm:$0xff]
    loop: start=0, step=1, limit=2
    $region62: #{tpu_custom_call.1} parent=1 // loop_pre_header
      _
    $region63: #{tpu_custom_call.1} parent=1 // loop_header
      %s577 = sphi 0, %s581
      %p578 = scmp.ge.s32.totalorder %s577, 2
      %v582 = vphi %v575, %v1292
    $region64: #{tpu_custom_call.1} parent=1 // loop_header_branch
      %580 = sbr.rel (%p578) target = $region68
    $region65: #{tpu_custom_call.1} parent=1 // loop_body
      %s583 = smul.u32 %s577, 32
      %s584 = sshra.s32 %s583, 3
      %s585 = sand.u32 %s583, 7
      %s586 = smul.u32 %s584, 4
      %s587 = smul.addr %s586, 8
      %s588 = scalar_lea.vmem [#allocation3], %s587
      %v589 = vld [vmem:[%s588] sm:$0xff]
      %v590 = vld [vmem:[%s588 + $0x8] sm:$0xff]
      %v591 = vld [vmem:[%s588 + $0x10] sm:$0xff]
      %v592 = vld [vmem:[%s588 + $0x18] sm:$0xff]
      %v593 = vld [vmem:[#allocation12] sm:$0xff]
      %v594 = vld [vmem:[#allocation12 + $0x8] sm:$0xff]
      %v595 = vld [vmem:[#allocation12 + $0x10] sm:$0xff]
      %v596 = vld [vmem:[#allocation12 + $0x18] sm:$0xff]
      %v597 = vld [vmem:[#allocation12 + $0x20] sm:$0xff]
      %v598 = vld [vmem:[#allocation12 + $0x28] sm:$0xff]
      %v599 = vld [vmem:[#allocation12 + $0x30] sm:$0xff]
      %v600 = vld [vmem:[#allocation12 + $0x38] sm:$0xff]
      %v601 = vld [vmem:[#allocation12 + $0x40] sm:$0xff]
      %v602 = vld [vmem:[#allocation12 + $0x48] sm:$0xff]
      %v603 = vld [vmem:[#allocation12 + $0x50] sm:$0xff]
      %v604 = vld [vmem:[#allocation12 + $0x58] sm:$0xff]
      %v605 = vld [vmem:[#allocation12 + $0x60] sm:$0xff]
      %v606 = vld [vmem:[#allocation12 + $0x68] sm:$0xff]
      %v607 = vld [vmem:[#allocation12 + $0x70] sm:$0xff]
      %v608 = vld [vmem:[#allocation12 + $0x78] sm:$0xff]
      %v609 = vld [vmem:[#allocation12 + $0x80] sm:$0xff]
      %v610 = vld [vmem:[#allocation12 + $0x88] sm:$0xff]
      %v611 = vld [vmem:[#allocation12 + $0x90] sm:$0xff]
      %v612 = vld [vmem:[#allocation12 + $0x98] sm:$0xff]
      %v613 = vld [vmem:[#allocation12 + $0xa0] sm:$0xff]
      %v614 = vld [vmem:[#allocation12 + $0xa8] sm:$0xff]
      %v615 = vld [vmem:[#allocation12 + $0xb0] sm:$0xff]
      %v616 = vld [vmem:[#allocation12 + $0xb8] sm:$0xff]
      %v617 = vld [vmem:[#allocation12 + $0xc0] sm:$0xff]
      %v618 = vld [vmem:[#allocation12 + $0xc8] sm:$0xff]
      %v619 = vld [vmem:[#allocation12 + $0xd0] sm:$0xff]
      %v620 = vld [vmem:[#allocation12 + $0xd8] sm:$0xff]
      %v621 = vld [vmem:[#allocation12 + $0xe0] sm:$0xff]
      %v622 = vld [vmem:[#allocation12 + $0xe8] sm:$0xff]
      %v623 = vld [vmem:[#allocation12 + $0xf0] sm:$0xff]
      %v624 = vld [vmem:[#allocation12 + $0xf8] sm:$0xff]
      %v625 = vld [vmem:[#allocation12 + $0x100] sm:$0xff]
      %v626 = vld [vmem:[#allocation12 + $0x108] sm:$0xff]
      %v627 = vld [vmem:[#allocation12 + $0x110] sm:$0xff]
      %v628 = vld [vmem:[#allocation12 + $0x118] sm:$0xff]
      %v629 = vld [vmem:[#allocation12 + $0x120] sm:$0xff]
      %v630 = vld [vmem:[#allocation12 + $0x128] sm:$0xff]
      %v631 = vld [vmem:[#allocation12 + $0x130] sm:$0xff]
      %v632 = vld [vmem:[#allocation12 + $0x138] sm:$0xff]
      %v633 = vld [vmem:[#allocation12 + $0x140] sm:$0xff]
      %v634 = vld [vmem:[#allocation12 + $0x148] sm:$0xff]
      %v635 = vld [vmem:[#allocation12 + $0x150] sm:$0xff]
      %v636 = vld [vmem:[#allocation12 + $0x158] sm:$0xff]
      %v637 = vld [vmem:[#allocation12 + $0x160] sm:$0xff]
      %v638 = vld [vmem:[#allocation12 + $0x168] sm:$0xff]
      %v639 = vld [vmem:[#allocation12 + $0x170] sm:$0xff]
      %v640 = vld [vmem:[#allocation12 + $0x178] sm:$0xff]
      %v641 = vld [vmem:[%s5] sm:$0x7]
      %v643 = vperm.slane %v641, 0
      %v644 = vperm.slane %v641, 1
      %v645 = vperm.slane %v641, 2
      %649 = vmatpush.msra.mxu0 %v638
      %650 = vmatpush.msra.mxu0 %v635
      %651 = vmatpush.msra.mxu0 %v632
      %652 = vmatpush.msra.mxu0 %v629
      %653 = vmatpush.msra.mxu0 %v626
      %654 = vmatpush.msra.mxu0 %v623
      %655 = vmatpush.msra.mxu0 %v620
      %656 = vmatpush.msra.mxu0 %v617
      %657 = vmatpush.msra.mxu0 %v614
      %658 = vmatpush.msra.mxu0 %v611
      %659 = vmatpush.msra.mxu0 %v608
      %660 = vmatpush.msra.mxu0 %v605
      %661 = vmatpush.msra.mxu0 %v602
      %662 = vmatpush.msra.mxu0 %v599
      %663 = vmatpush.msra.mxu0 %v596
      %664 = vmatpush.msra.mxu0 %v593
      %665 = vmatmul.f32.gmra.mxu0 %v582
      %v666 = vpop.f32.mrf.mxu0
      %v667 = vadd.f32 %v643, %v666
      %668 = vdwg.mxu0
      %669 = vmatpush.msra.mxu0 %v639
      %670 = vmatpush.msra.mxu0 %v636
      %671 = vmatpush.msra.mxu0 %v633
      %672 = vmatpush.msra.mxu0 %v630
      %673 = vmatpush.msra.mxu0 %v627
      %674 = vmatpush.msra.mxu0 %v624
      %675 = vmatpush.msra.mxu0 %v621
      %676 = vmatpush.msra.mxu0 %v618
      %677 = vmatpush.msra.mxu0 %v615
      %678 = vmatpush.msra.mxu0 %v612
      %679 = vmatpush.msra.mxu0 %v609
      %680 = vmatpush.msra.mxu0 %v606
      %681 = vmatpush.msra.mxu0 %v603
      %682 = vmatpush.msra.mxu0 %v600
      %683 = vmatpush.msra.mxu0 %v597
      %684 = vmatpush.msra.mxu0 %v594
      %685 = vmatmul.f32.gmra.mxu0 %v582
      %v686 = vpop.f32.mrf.mxu0
      %v687 = vadd.f32 %v644, %v686
      %688 = vdwg.mxu0
      %689 = vmatpush.msra.mxu0 %v640
      %690 = vmatpush.msra.mxu0 %v637
      %691 = vmatpush.msra.mxu0 %v634
      %692 = vmatpush.msra.mxu0 %v631
      %693 = vmatpush.msra.mxu0 %v628
      %694 = vmatpush.msra.mxu0 %v625
      %695 = vmatpush.msra.mxu0 %v622
      %696 = vmatpush.msra.mxu0 %v619
      %697 = vmatpush.msra.mxu0 %v616
      %698 = vmatpush.msra.mxu0 %v613
      %699 = vmatpush.msra.mxu0 %v610
      %700 = vmatpush.msra.mxu0 %v607
      %701 = vmatpush.msra.mxu0 %v604
      %702 = vmatpush.msra.mxu0 %v601
      %703 = vmatpush.msra.mxu0 %v598
      %704 = vmatpush.msra.mxu0 %v595
      %705 = vmatmul.f32.gmra.mxu0 %v582
      %v706 = vpop.f32.mrf.mxu0
      %v707 = vadd.f32 %v645, %v706
      %708 = vdwg.mxu0
      %v709 = vadd.f32 %v589, %v667
      %v710 = vxor.u32 %v709, 2147483648
      %v711 = vmul.f32 %v710, 1.442695
      %v712 = vpow.pop %v711
      %v713 = vadd.f32 %v712, 1.0
      %v714 = vrcp.pop %v713
      %v715 = vmul.f32 %v713, %v714
      %v716 = vsub.f32 1.0, %v715
      %v717 = vmul.f32 %v714, %v716
      %v718 = vadd.f32 %v714, %v717
      %vm719 = vweird.f32 %v713
      %vm720 = vweird.f32 %v714
      %vm721 = vmor %vm719, %vm720
      %v722 = vsel %vm721, %v714, %v718
      %v723 = vand.u32 2147483647, %v713
      %vm724 = vcmp.eq.f32.partialorder %v723, 8.507059e+37
      %v725 = vand.u32 %v713, 2147483648
      %v726 = vor.u32 1.1754944e-38, %v725
      %v727 = vsel %vm724, %v726, %v722
      %v728 = vmul.f32 1.0, %v727
      %v729 = vadd.f32 %v590, %v687
      %v730 = vxor.u32 %v729, 2147483648
      %v731 = vmul.f32 %v730, 1.442695
      %v732 = vpow.pop %v731
      %v733 = vadd.f32 %v732, 1.0
      %v734 = vrcp.pop %v733
      %v735 = vmul.f32 %v733, %v734
      %v736 = vsub.f32 1.0, %v735
      %v737 = vmul.f32 %v734, %v736
      %v738 = vadd.f32 %v734, %v737
      %vm739 = vweird.f32 %v733
      %vm740 = vweird.f32 %v734
      %vm741 = vmor %vm739, %vm740
      %v742 = vsel %vm741, %v734, %v738
      %v743 = vand.u32 2147483647, %v733
      %vm744 = vcmp.eq.f32.partialorder %v743, 8.507059e+37
      %v745 = vand.u32 %v733, 2147483648
      %v746 = vor.u32 1.1754944e-38, %v745
      %v747 = vsel %vm744, %v746, %v742
      %v748 = vmul.f32 1.0, %v747
      %v749 = vmul.f32 %v728, %v707
      %v750 = vadd.f32 %v591, %v749
      %v751 = vtanh.pop %v750
      %v752 = vsub.f32 %v582, %v751
      %v753 = vmul.f32 %v748, %v752
      %v754 = vadd.f32 %v751, %v753
      %s755 = scalar_lea.vmem [#allocation4], %s583
      %v756 = vld [vmem:[%s755] sm:$0xff]
      %v757 = vsub.f32 %v754, %v756
      %v758 = vmul.f32 %v592, %v757
      %v759 = vadd.f32 %v758, %v756
      %760 = vst [vmem:[%s588] sm:$0xff] %v759
      %s761 = smul.u32 %s577, 4
      %s762 = sadd.s32 %s761, 1
      %s763 = smul.u32 %s762, 8
      %s764 = sshra.s32 %s763, 3
      %s765 = sand.u32 %s763, 7
      %s766 = smul.u32 %s764, 4
      %s767 = smul.addr %s766, 8
      %s768 = scalar_lea.vmem [#allocation3], %s767
      %v769 = vld [vmem:[%s768] sm:$0xff]
      %v770 = vld [vmem:[%s768 + $0x8] sm:$0xff]
      %v771 = vld [vmem:[%s768 + $0x10] sm:$0xff]
      %v772 = vld [vmem:[%s768 + $0x18] sm:$0xff]
      %v773 = vld [vmem:[#allocation12] sm:$0xff]
      %v774 = vld [vmem:[#allocation12 + $0x8] sm:$0xff]
      %v775 = vld [vmem:[#allocation12 + $0x10] sm:$0xff]
      %v776 = vld [vmem:[#allocation12 + $0x18] sm:$0xff]
      %v777 = vld [vmem:[#allocation12 + $0x20] sm:$0xff]
      %v778 = vld [vmem:[#allocation12 + $0x28] sm:$0xff]
      %v779 = vld [vmem:[#allocation12 + $0x30] sm:$0xff]
      %v780 = vld [vmem:[#allocation12 + $0x38] sm:$0xff]
      %v781 = vld [vmem:[#allocation12 + $0x40] sm:$0xff]
      %v782 = vld [vmem:[#allocation12 + $0x48] sm:$0xff]
      %v783 = vld [vmem:[#allocation12 + $0x50] sm:$0xff]
      %v784 = vld [vmem:[#allocation12 + $0x58] sm:$0xff]
      %v785 = vld [vmem:[#allocation12 + $0x60] sm:$0xff]
      %v786 = vld [vmem:[#allocation12 + $0x68] sm:$0xff]
      %v787 = vld [vmem:[#allocation12 + $0x70] sm:$0xff]
      %v788 = vld [vmem:[#allocation12 + $0x78] sm:$0xff]
      %v789 = vld [vmem:[#allocation12 + $0x80] sm:$0xff]
      %v790 = vld [vmem:[#allocation12 + $0x88] sm:$0xff]
      %v791 = vld [vmem:[#allocation12 + $0x90] sm:$0xff]
      %v792 = vld [vmem:[#allocation12 + $0x98] sm:$0xff]
      %v793 = vld [vmem:[#allocation12 + $0xa0] sm:$0xff]
      %v794 = vld [vmem:[#allocation12 + $0xa8] sm:$0xff]
      %v795 = vld [vmem:[#allocation12 + $0xb0] sm:$0xff]
      %v796 = vld [vmem:[#allocation12 + $0xb8] sm:$0xff]
      %v797 = vld [vmem:[#allocation12 + $0xc0] sm:$0xff]
      %v798 = vld [vmem:[#allocation12 + $0xc8] sm:$0xff]
      %v799 = vld [vmem:[#allocation12 + $0xd0] sm:$0xff]
      %v800 = vld [vmem:[#allocation12 + $0xd8] sm:$0xff]
      %v801 = vld [vmem:[#allocation12 + $0xe0] sm:$0xff]
      %v802 = vld [vmem:[#allocation12 + $0xe8] sm:$0xff]
      %v803 = vld [vmem:[#allocation12 + $0xf0] sm:$0xff]
      %v804 = vld [vmem:[#allocation12 + $0xf8] sm:$0xff]
      %v805 = vld [vmem:[#allocation12 + $0x100] sm:$0xff]
      %v806 = vld [vmem:[#allocation12 + $0x108] sm:$0xff]
      %v807 = vld [vmem:[#allocation12 + $0x110] sm:$0xff]
      %v808 = vld [vmem:[#allocation12 + $0x118] sm:$0xff]
      %v809 = vld [vmem:[#allocation12 + $0x120] sm:$0xff]
      %v810 = vld [vmem:[#allocation12 + $0x128] sm:$0xff]
      %v811 = vld [vmem:[#allocation12 + $0x130] sm:$0xff]
      %v812 = vld [vmem:[#allocation12 + $0x138] sm:$0xff]
      %v813 = vld [vmem:[#allocation12 + $0x140] sm:$0xff]
      %v814 = vld [vmem:[#allocation12 + $0x148] sm:$0xff]
      %v815 = vld [vmem:[#allocation12 + $0x150] sm:$0xff]
      %v816 = vld [vmem:[#allocation12 + $0x158] sm:$0xff]
      %v817 = vld [vmem:[#allocation12 + $0x160] sm:$0xff]
      %v818 = vld [vmem:[#allocation12 + $0x168] sm:$0xff]
      %v819 = vld [vmem:[#allocation12 + $0x170] sm:$0xff]
      %v820 = vld [vmem:[#allocation12 + $0x178] sm:$0xff]
      %v821 = vld [vmem:[%s5] sm:$0x7]
      %v823 = vperm.slane %v821, 0
      %v824 = vperm.slane %v821, 1
      %v825 = vperm.slane %v821, 2
      %829 = vmatpush.msra.mxu0 %v818
      %830 = vmatpush.msra.mxu0 %v815
      %831 = vmatpush.msra.mxu0 %v812
      %832 = vmatpush.msra.mxu0 %v809
      %833 = vmatpush.msra.mxu0 %v806
      %834 = vmatpush.msra.mxu0 %v803
      %835 = vmatpush.msra.mxu0 %v800
      %836 = vmatpush.msra.mxu0 %v797
      %837 = vmatpush.msra.mxu0 %v794
      %838 = vmatpush.msra.mxu0 %v791
      %839 = vmatpush.msra.mxu0 %v788
      %840 = vmatpush.msra.mxu0 %v785
      %841 = vmatpush.msra.mxu0 %v782
      %842 = vmatpush.msra.mxu0 %v779
      %843 = vmatpush.msra.mxu0 %v776
      %844 = vmatpush.msra.mxu0 %v773
      %845 = vmatmul.f32.gmra.mxu0 %v754
      %v846 = vpop.f32.mrf.mxu0
      %v847 = vadd.f32 %v823, %v846
      %848 = vdwg.mxu0
      %849 = vmatpush.msra.mxu0 %v819
      %850 = vmatpush.msra.mxu0 %v816
      %851 = vmatpush.msra.mxu0 %v813
      %852 = vmatpush.msra.mxu0 %v810
      %853 = vmatpush.msra.mxu0 %v807
      %854 = vmatpush.msra.mxu0 %v804
      %855 = vmatpush.msra.mxu0 %v801
      %856 = vmatpush.msra.mxu0 %v798
      %857 = vmatpush.msra.mxu0 %v795
      %858 = vmatpush.msra.mxu0 %v792
      %859 = vmatpush.msra.mxu0 %v789
      %860 = vmatpush.msra.mxu0 %v786
      %861 = vmatpush.msra.mxu0 %v783
      %862 = vmatpush.msra.mxu0 %v780
      %863 = vmatpush.msra.mxu0 %v777
      %864 = vmatpush.msra.mxu0 %v774
      %865 = vmatmul.f32.gmra.mxu0 %v754
      %v866 = vpop.f32.mrf.mxu0
      %v867 = vadd.f32 %v824, %v866
      %868 = vdwg.mxu0
      %869 = vmatpush.msra.mxu0 %v820
      %870 = vmatpush.msra.mxu0 %v817
      %871 = vmatpush.msra.mxu0 %v814
      %872 = vmatpush.msra.mxu0 %v811
      %873 = vmatpush.msra.mxu0 %v808
      %874 = vmatpush.msra.mxu0 %v805
      %875 = vmatpush.msra.mxu0 %v802
      %876 = vmatpush.msra.mxu0 %v799
      %877 = vmatpush.msra.mxu0 %v796
      %878 = vmatpush.msra.mxu0 %v793
      %879 = vmatpush.msra.mxu0 %v790
      %880 = vmatpush.msra.mxu0 %v787
      %881 = vmatpush.msra.mxu0 %v784
      %882 = vmatpush.msra.mxu0 %v781
      %883 = vmatpush.msra.mxu0 %v778
      %884 = vmatpush.msra.mxu0 %v775
      %885 = vmatmul.f32.gmra.mxu0 %v754
      %v886 = vpop.f32.mrf.mxu0
      %v887 = vadd.f32 %v825, %v886
      %888 = vdwg.mxu0
      %v889 = vadd.f32 %v769, %v847
      %v890 = vxor.u32 %v889, 2147483648
      %v891 = vmul.f32 %v890, 1.442695
      %v892 = vpow.pop %v891
      %v893 = vadd.f32 %v892, 1.0
      %v894 = vrcp.pop %v893
      %v895 = vmul.f32 %v893, %v894
      %v896 = vsub.f32 1.0, %v895
      %v897 = vmul.f32 %v894, %v896
      %v898 = vadd.f32 %v894, %v897
      %vm899 = vweird.f32 %v893
      %vm900 = vweird.f32 %v894
      %vm901 = vmor %vm899, %vm900
      %v902 = vsel %vm901, %v894, %v898
      %v903 = vand.u32 2147483647, %v893
      %vm904 = vcmp.eq.f32.partialorder %v903, 8.507059e+37
      %v905 = vand.u32 %v893, 2147483648
      %v906 = vor.u32 1.1754944e-38, %v905
      %v907 = vsel %vm904, %v906, %v902
      %v908 = vmul.f32 1.0, %v907
      %v909 = vadd.f32 %v770, %v867
      %v910 = vxor.u32 %v909, 2147483648
      %v911 = vmul.f32 %v910, 1.442695
      %v912 = vpow.pop %v911
      %v913 = vadd.f32 %v912, 1.0
      %v914 = vrcp.pop %v913
      %v915 = vmul.f32 %v913, %v914
      %v916 = vsub.f32 1.0, %v915
      %v917 = vmul.f32 %v914, %v916
      %v918 = vadd.f32 %v914, %v917
      %vm919 = vweird.f32 %v913
      %vm920 = vweird.f32 %v914
      %vm921 = vmor %vm919, %vm920
      %v922 = vsel %vm921, %v914, %v918
      %v923 = vand.u32 2147483647, %v913
      %vm924 = vcmp.eq.f32.partialorder %v923, 8.507059e+37
      %v925 = vand.u32 %v913, 2147483648
      %v926 = vor.u32 1.1754944e-38, %v925
      %v927 = vsel %vm924, %v926, %v922
      %v928 = vmul.f32 1.0, %v927
      %v929 = vmul.f32 %v908, %v887
      %v930 = vadd.f32 %v771, %v929
      %v931 = vtanh.pop %v930
      %v932 = vsub.f32 %v754, %v931
      %v933 = vmul.f32 %v928, %v932
      %v934 = vadd.f32 %v931, %v933
      %s935 = scalar_lea.vmem [#allocation4], %s763
      %v936 = vld [vmem:[%s935] sm:$0xff]
      %v937 = vsub.f32 %v934, %v936
      %v938 = vmul.f32 %v772, %v937
      %v939 = vadd.f32 %v938, %v936
      %940 = vst [vmem:[%s768] sm:$0xff] %v939
      %s941 = sadd.s32 %s761, 2
      %s942 = smul.u32 %s941, 8
      %s943 = sshra.s32 %s942, 3
      %s944 = sand.u32 %s942, 7
      %s945 = smul.u32 %s943, 4
      %s946 = smul.addr %s945, 8
      %s947 = scalar_lea.vmem [#allocation3], %s946
      %v948 = vld [vmem:[%s947] sm:$0xff]
      %v949 = vld [vmem:[%s947 + $0x8] sm:$0xff]
      %v950 = vld [vmem:[%s947 + $0x10] sm:$0xff]
      %v951 = vld [vmem:[%s947 + $0x18] sm:$0xff]
      %v952 = vld [vmem:[#allocation12] sm:$0xff]
      %v953 = vld [vmem:[#allocation12 + $0x8] sm:$0xff]
      %v954 = vld [vmem:[#allocation12 + $0x10] sm:$0xff]
      %v955 = vld [vmem:[#allocation12 + $0x18] sm:$0xff]
      %v956 = vld [vmem:[#allocation12 + $0x20] sm:$0xff]
      %v957 = vld [vmem:[#allocation12 + $0x28] sm:$0xff]
      %v958 = vld [vmem:[#allocation12 + $0x30] sm:$0xff]
      %v959 = vld [vmem:[#allocation12 + $0x38] sm:$0xff]
      %v960 = vld [vmem:[#allocation12 + $0x40] sm:$0xff]
      %v961 = vld [vmem:[#allocation12 + $0x48] sm:$0xff]
      %v962 = vld [vmem:[#allocation12 + $0x50] sm:$0xff]
      %v963 = vld [vmem:[#allocation12 + $0x58] sm:$0xff]
      %v964 = vld [vmem:[#allocation12 + $0x60] sm:$0xff]
      %v965 = vld [vmem:[#allocation12 + $0x68] sm:$0xff]
      %v966 = vld [vmem:[#allocation12 + $0x70] sm:$0xff]
      %v967 = vld [vmem:[#allocation12 + $0x78] sm:$0xff]
      %v968 = vld [vmem:[#allocation12 + $0x80] sm:$0xff]
      %v969 = vld [vmem:[#allocation12 + $0x88] sm:$0xff]
      %v970 = vld [vmem:[#allocation12 + $0x90] sm:$0xff]
      %v971 = vld [vmem:[#allocation12 + $0x98] sm:$0xff]
      %v972 = vld [vmem:[#allocation12 + $0xa0] sm:$0xff]
      %v973 = vld [vmem:[#allocation12 + $0xa8] sm:$0xff]
      %v974 = vld [vmem:[#allocation12 + $0xb0] sm:$0xff]
      %v975 = vld [vmem:[#allocation12 + $0xb8] sm:$0xff]
      %v976 = vld [vmem:[#allocation12 + $0xc0] sm:$0xff]
      %v977 = vld [vmem:[#allocation12 + $0xc8] sm:$0xff]
      %v978 = vld [vmem:[#allocation12 + $0xd0] sm:$0xff]
      %v979 = vld [vmem:[#allocation12 + $0xd8] sm:$0xff]
      %v980 = vld [vmem:[#allocation12 + $0xe0] sm:$0xff]
      %v981 = vld [vmem:[#allocation12 + $0xe8] sm:$0xff]
      %v982 = vld [vmem:[#allocation12 + $0xf0] sm:$0xff]
      %v983 = vld [vmem:[#allocation12 + $0xf8] sm:$0xff]
      %v984 = vld [vmem:[#allocation12 + $0x100] sm:$0xff]
      %v985 = vld [vmem:[#allocation12 + $0x108] sm:$0xff]
      %v986 = vld [vmem:[#allocation12 + $0x110] sm:$0xff]
      %v987 = vld [vmem:[#allocation12 + $0x118] sm:$0xff]
      %v988 = vld [vmem:[#allocation12 + $0x120] sm:$0xff]
      %v989 = vld [vmem:[#allocation12 + $0x128] sm:$0xff]
      %v990 = vld [vmem:[#allocation12 + $0x130] sm:$0xff]
      %v991 = vld [vmem:[#allocation12 + $0x138] sm:$0xff]
      %v992 = vld [vmem:[#allocation12 + $0x140] sm:$0xff]
      %v993 = vld [vmem:[#allocation12 + $0x148] sm:$0xff]
      %v994 = vld [vmem:[#allocation12 + $0x150] sm:$0xff]
      %v995 = vld [vmem:[#allocation12 + $0x158] sm:$0xff]
      %v996 = vld [vmem:[#allocation12 + $0x160] sm:$0xff]
      %v997 = vld [vmem:[#allocation12 + $0x168] sm:$0xff]
      %v998 = vld [vmem:[#allocation12 + $0x170] sm:$0xff]
      %v999 = vld [vmem:[#allocation12 + $0x178] sm:$0xff]
      %v1000 = vld [vmem:[%s5] sm:$0x7]
      %v1002 = vperm.slane %v1000, 0
      %v1003 = vperm.slane %v1000, 1
      %v1004 = vperm.slane %v1000, 2
      %1008 = vmatpush.msra.mxu0 %v997
      %1009 = vmatpush.msra.mxu0 %v994
      %1010 = vmatpush.msra.mxu0 %v991
      %1011 = vmatpush.msra.mxu0 %v988
      %1012 = vmatpush.msra.mxu0 %v985
      %1013 = vmatpush.msra.mxu0 %v982
      %1014 = vmatpush.msra.mxu0 %v979
      %1015 = vmatpush.msra.mxu0 %v976
      %1016 = vmatpush.msra.mxu0 %v973
      %1017 = vmatpush.msra.mxu0 %v970
      %1018 = vmatpush.msra.mxu0 %v967
      %1019 = vmatpush.msra.mxu0 %v964
      %1020 = vmatpush.msra.mxu0 %v961
      %1021 = vmatpush.msra.mxu0 %v958
      %1022 = vmatpush.msra.mxu0 %v955
      %1023 = vmatpush.msra.mxu0 %v952
      %1024 = vmatmul.f32.gmra.mxu0 %v934
      %v1025 = vpop.f32.mrf.mxu0
      %v1026 = vadd.f32 %v1002, %v1025
      %1027 = vdwg.mxu0
      %1028 = vmatpush.msra.mxu0 %v998
      %1029 = vmatpush.msra.mxu0 %v995
      %1030 = vmatpush.msra.mxu0 %v992
      %1031 = vmatpush.msra.mxu0 %v989
      %1032 = vmatpush.msra.mxu0 %v986
      %1033 = vmatpush.msra.mxu0 %v983
      %1034 = vmatpush.msra.mxu0 %v980
      %1035 = vmatpush.msra.mxu0 %v977
      %1036 = vmatpush.msra.mxu0 %v974
      %1037 = vmatpush.msra.mxu0 %v971
      %1038 = vmatpush.msra.mxu0 %v968
      %1039 = vmatpush.msra.mxu0 %v965
      %1040 = vmatpush.msra.mxu0 %v962
      %1041 = vmatpush.msra.mxu0 %v959
      %1042 = vmatpush.msra.mxu0 %v956
      %1043 = vmatpush.msra.mxu0 %v953
      %1044 = vmatmul.f32.gmra.mxu0 %v934
      %v1045 = vpop.f32.mrf.mxu0
      %v1046 = vadd.f32 %v1003, %v1045
      %1047 = vdwg.mxu0
      %1048 = vmatpush.msra.mxu0 %v999
      %1049 = vmatpush.msra.mxu0 %v996
      %1050 = vmatpush.msra.mxu0 %v993
      %1051 = vmatpush.msra.mxu0 %v990
      %1052 = vmatpush.msra.mxu0 %v987
      %1053 = vmatpush.msra.mxu0 %v984
      %1054 = vmatpush.msra.mxu0 %v981
      %1055 = vmatpush.msra.mxu0 %v978
      %1056 = vmatpush.msra.mxu0 %v975
      %1057 = vmatpush.msra.mxu0 %v972
      %1058 = vmatpush.msra.mxu0 %v969
      %1059 = vmatpush.msra.mxu0 %v966
      %1060 = vmatpush.msra.mxu0 %v963
      %1061 = vmatpush.msra.mxu0 %v960
      %1062 = vmatpush.msra.mxu0 %v957
      %1063 = vmatpush.msra.mxu0 %v954
      %1064 = vmatmul.f32.gmra.mxu0 %v934
      %v1065 = vpop.f32.mrf.mxu0
      %v1066 = vadd.f32 %v1004, %v1065
      %1067 = vdwg.mxu0
      %v1068 = vadd.f32 %v948, %v1026
      %v1069 = vxor.u32 %v1068, 2147483648
      %v1070 = vmul.f32 %v1069, 1.442695
      %v1071 = vpow.pop %v1070
      %v1072 = vadd.f32 %v1071, 1.0
      %v1073 = vrcp.pop %v1072
      %v1074 = vmul.f32 %v1072, %v1073
      %v1075 = vsub.f32 1.0, %v1074
      %v1076 = vmul.f32 %v1073, %v1075
      %v1077 = vadd.f32 %v1073, %v1076
      %vm1078 = vweird.f32 %v1072
      %vm1079 = vweird.f32 %v1073
      %vm1080 = vmor %vm1078, %vm1079
      %v1081 = vsel %vm1080, %v1073, %v1077
      %v1082 = vand.u32 2147483647, %v1072
      %vm1083 = vcmp.eq.f32.partialorder %v1082, 8.507059e+37
      %v1084 = vand.u32 %v1072, 2147483648
      %v1085 = vor.u32 1.1754944e-38, %v1084
      %v1086 = vsel %vm1083, %v1085, %v1081
      %v1087 = vmul.f32 1.0, %v1086
      %v1088 = vadd.f32 %v949, %v1046
      %v1089 = vxor.u32 %v1088, 2147483648
      %v1090 = vmul.f32 %v1089, 1.442695
      %v1091 = vpow.pop %v1090
      %v1092 = vadd.f32 %v1091, 1.0
      %v1093 = vrcp.pop %v1092
      %v1094 = vmul.f32 %v1092, %v1093
      %v1095 = vsub.f32 1.0, %v1094
      %v1096 = vmul.f32 %v1093, %v1095
      %v1097 = vadd.f32 %v1093, %v1096
      %vm1098 = vweird.f32 %v1092
      %vm1099 = vweird.f32 %v1093
      %vm1100 = vmor %vm1098, %vm1099
      %v1101 = vsel %vm1100, %v1093, %v1097
      %v1102 = vand.u32 2147483647, %v1092
      %vm1103 = vcmp.eq.f32.partialorder %v1102, 8.507059e+37
      %v1104 = vand.u32 %v1092, 2147483648
      %v1105 = vor.u32 1.1754944e-38, %v1104
      %v1106 = vsel %vm1103, %v1105, %v1101
      %v1107 = vmul.f32 1.0, %v1106
      %v1108 = vmul.f32 %v1087, %v1066
      %v1109 = vadd.f32 %v950, %v1108
      %v1110 = vtanh.pop %v1109
      %v1111 = vsub.f32 %v934, %v1110
      %v1112 = vmul.f32 %v1107, %v1111
      %v1113 = vadd.f32 %v1110, %v1112
      %s1114 = scalar_lea.vmem [#allocation4], %s942
      %v1115 = vld [vmem:[%s1114] sm:$0xff]
      %v1116 = vsub.f32 %v1113, %v1115
      %v1117 = vmul.f32 %v951, %v1116
      %v1118 = vadd.f32 %v1117, %v1115
      %1119 = vst [vmem:[%s947] sm:$0xff] %v1118
      %s1120 = sadd.s32 %s761, 3
      %s1121 = smul.u32 %s1120, 8
      %s1122 = sshra.s32 %s1121, 3
      %s1123 = sand.u32 %s1121, 7
      %s1124 = smul.u32 %s1122, 4
      %s1125 = smul.addr %s1124, 8
      %s1126 = scalar_lea.vmem [#allocation3], %s1125
      %v1127 = vld [vmem:[%s1126] sm:$0xff]
      %v1128 = vld [vmem:[%s1126 + $0x8] sm:$0xff]
      %v1129 = vld [vmem:[%s1126 + $0x10] sm:$0xff]
      %v1130 = vld [vmem:[%s1126 + $0x18] sm:$0xff]
      %v1131 = vld [vmem:[#allocation12] sm:$0xff]
      %v1132 = vld [vmem:[#allocation12 + $0x8] sm:$0xff]
      %v1133 = vld [vmem:[#allocation12 + $0x10] sm:$0xff]
      %v1134 = vld [vmem:[#allocation12 + $0x18] sm:$0xff]
      %v1135 = vld [vmem:[#allocation12 + $0x20] sm:$0xff]
      %v1136 = vld [vmem:[#allocation12 + $0x28] sm:$0xff]
      %v1137 = vld [vmem:[#allocation12 + $0x30] sm:$0xff]
      %v1138 = vld [vmem:[#allocation12 + $0x38] sm:$0xff]
      %v1139 = vld [vmem:[#allocation12 + $0x40] sm:$0xff]
      %v1140 = vld [vmem:[#allocation12 + $0x48] sm:$0xff]
      %v1141 = vld [vmem:[#allocation12 + $0x50] sm:$0xff]
      %v1142 = vld [vmem:[#allocation12 + $0x58] sm:$0xff]
      %v1143 = vld [vmem:[#allocation12 + $0x60] sm:$0xff]
      %v1144 = vld [vmem:[#allocation12 + $0x68] sm:$0xff]
      %v1145 = vld [vmem:[#allocation12 + $0x70] sm:$0xff]
      %v1146 = vld [vmem:[#allocation12 + $0x78] sm:$0xff]
      %v1147 = vld [vmem:[#allocation12 + $0x80] sm:$0xff]
      %v1148 = vld [vmem:[#allocation12 + $0x88] sm:$0xff]
      %v1149 = vld [vmem:[#allocation12 + $0x90] sm:$0xff]
      %v1150 = vld [vmem:[#allocation12 + $0x98] sm:$0xff]
      %v1151 = vld [vmem:[#allocation12 + $0xa0] sm:$0xff]
      %v1152 = vld [vmem:[#allocation12 + $0xa8] sm:$0xff]
      %v1153 = vld [vmem:[#allocation12 + $0xb0] sm:$0xff]
      %v1154 = vld [vmem:[#allocation12 + $0xb8] sm:$0xff]
      %v1155 = vld [vmem:[#allocation12 + $0xc0] sm:$0xff]
      %v1156 = vld [vmem:[#allocation12 + $0xc8] sm:$0xff]
      %v1157 = vld [vmem:[#allocation12 + $0xd0] sm:$0xff]
      %v1158 = vld [vmem:[#allocation12 + $0xd8] sm:$0xff]
      %v1159 = vld [vmem:[#allocation12 + $0xe0] sm:$0xff]
      %v1160 = vld [vmem:[#allocation12 + $0xe8] sm:$0xff]
      %v1161 = vld [vmem:[#allocation12 + $0xf0] sm:$0xff]
      %v1162 = vld [vmem:[#allocation12 + $0xf8] sm:$0xff]
      %v1163 = vld [vmem:[#allocation12 + $0x100] sm:$0xff]
      %v1164 = vld [vmem:[#allocation12 + $0x108] sm:$0xff]
      %v1165 = vld [vmem:[#allocation12 + $0x110] sm:$0xff]
      %v1166 = vld [vmem:[#allocation12 + $0x118] sm:$0xff]
      %v1167 = vld [vmem:[#allocation12 + $0x120] sm:$0xff]
      %v1168 = vld [vmem:[#allocation12 + $0x128] sm:$0xff]
      %v1169 = vld [vmem:[#allocation12 + $0x130] sm:$0xff]
      %v1170 = vld [vmem:[#allocation12 + $0x138] sm:$0xff]
      %v1171 = vld [vmem:[#allocation12 + $0x140] sm:$0xff]
      %v1172 = vld [vmem:[#allocation12 + $0x148] sm:$0xff]
      %v1173 = vld [vmem:[#allocation12 + $0x150] sm:$0xff]
      %v1174 = vld [vmem:[#allocation12 + $0x158] sm:$0xff]
      %v1175 = vld [vmem:[#allocation12 + $0x160] sm:$0xff]
      %v1176 = vld [vmem:[#allocation12 + $0x168] sm:$0xff]
      %v1177 = vld [vmem:[#allocation12 + $0x170] sm:$0xff]
      %v1178 = vld [vmem:[#allocation12 + $0x178] sm:$0xff]
      %v1179 = vld [vmem:[%s5] sm:$0x7]
      %v1181 = vperm.slane %v1179, 0
      %v1182 = vperm.slane %v1179, 1
      %v1183 = vperm.slane %v1179, 2
      %1187 = vmatpush.msra.mxu0 %v1176
      %1188 = vmatpush.msra.mxu0 %v1173
      %1189 = vmatpush.msra.mxu0 %v1170
      %1190 = vmatpush.msra.mxu0 %v1167
      %1191 = vmatpush.msra.mxu0 %v1164
      %1192 = vmatpush.msra.mxu0 %v1161
      %1193 = vmatpush.msra.mxu0 %v1158
      %1194 = vmatpush.msra.mxu0 %v1155
      %1195 = vmatpush.msra.mxu0 %v1152
      %1196 = vmatpush.msra.mxu0 %v1149
      %1197 = vmatpush.msra.mxu0 %v1146
      %1198 = vmatpush.msra.mxu0 %v1143
      %1199 = vmatpush.msra.mxu0 %v1140
      %1200 = vmatpush.msra.mxu0 %v1137
      %1201 = vmatpush.msra.mxu0 %v1134
      %1202 = vmatpush.msra.mxu0 %v1131
      %1203 = vmatmul.f32.gmra.mxu0 %v1113
      %v1204 = vpop.f32.mrf.mxu0
      %v1205 = vadd.f32 %v1181, %v1204
      %1206 = vdwg.mxu0
      %1207 = vmatpush.msra.mxu0 %v1177
      %1208 = vmatpush.msra.mxu0 %v1174
      %1209 = vmatpush.msra.mxu0 %v1171
      %1210 = vmatpush.msra.mxu0 %v1168
      %1211 = vmatpush.msra.mxu0 %v1165
      %1212 = vmatpush.msra.mxu0 %v1162
      %1213 = vmatpush.msra.mxu0 %v1159
      %1214 = vmatpush.msra.mxu0 %v1156
      %1215 = vmatpush.msra.mxu0 %v1153
      %1216 = vmatpush.msra.mxu0 %v1150
      %1217 = vmatpush.msra.mxu0 %v1147
      %1218 = vmatpush.msra.mxu0 %v1144
      %1219 = vmatpush.msra.mxu0 %v1141
      %1220 = vmatpush.msra.mxu0 %v1138
      %1221 = vmatpush.msra.mxu0 %v1135
      %1222 = vmatpush.msra.mxu0 %v1132
      %1223 = vmatmul.f32.gmra.mxu0 %v1113
      %v1224 = vpop.f32.mrf.mxu0
      %v1225 = vadd.f32 %v1182, %v1224
      %1226 = vdwg.mxu0
      %1227 = vmatpush.msra.mxu0 %v1178
      %1228 = vmatpush.msra.mxu0 %v1175
      %1229 = vmatpush.msra.mxu0 %v1172
      %1230 = vmatpush.msra.mxu0 %v1169
      %1231 = vmatpush.msra.mxu0 %v1166
      %1232 = vmatpush.msra.mxu0 %v1163
      %1233 = vmatpush.msra.mxu0 %v1160
      %1234 = vmatpush.msra.mxu0 %v1157
      %1235 = vmatpush.msra.mxu0 %v1154
      %1236 = vmatpush.msra.mxu0 %v1151
      %1237 = vmatpush.msra.mxu0 %v1148
      %1238 = vmatpush.msra.mxu0 %v1145
      %1239 = vmatpush.msra.mxu0 %v1142
      %1240 = vmatpush.msra.mxu0 %v1139
      %1241 = vmatpush.msra.mxu0 %v1136
      %1242 = vmatpush.msra.mxu0 %v1133
      %1243 = vmatmul.f32.gmra.mxu0 %v1113
      %v1244 = vpop.f32.mrf.mxu0
      %v1245 = vadd.f32 %v1183, %v1244
      %1246 = vdwg.mxu0
      %v1247 = vadd.f32 %v1127, %v1205
      %v1248 = vxor.u32 %v1247, 2147483648
      %v1249 = vmul.f32 %v1248, 1.442695
      %v1250 = vpow.pop %v1249
      %v1251 = vadd.f32 %v1250, 1.0
      %v1252 = vrcp.pop %v1251
      %v1253 = vmul.f32 %v1251, %v1252
      %v1254 = vsub.f32 1.0, %v1253
      %v1255 = vmul.f32 %v1252, %v1254
      %v1256 = vadd.f32 %v1252, %v1255
      %vm1257 = vweird.f32 %v1251
      %vm1258 = vweird.f32 %v1252
      %vm1259 = vmor %vm1257, %vm1258
      %v1260 = vsel %vm1259, %v1252, %v1256
      %v1261 = vand.u32 2147483647, %v1251
      %vm1262 = vcmp.eq.f32.partialorder %v1261, 8.507059e+37
      %v1263 = vand.u32 %v1251, 2147483648
      %v1264 = vor.u32 1.1754944e-38, %v1263
      %v1265 = vsel %vm1262, %v1264, %v1260
      %v1266 = vmul.f32 1.0, %v1265
      %v1267 = vadd.f32 %v1128, %v1225
      %v1268 = vxor.u32 %v1267, 2147483648
      %v1269 = vmul.f32 %v1268, 1.442695
      %v1270 = vpow.pop %v1269
      %v1271 = vadd.f32 %v1270, 1.0
      %v1272 = vrcp.pop %v1271
      %v1273 = vmul.f32 %v1271, %v1272
      %v1274 = vsub.f32 1.0, %v1273
      %v1275 = vmul.f32 %v1272, %v1274
      %v1276 = vadd.f32 %v1272, %v1275
      %vm1277 = vweird.f32 %v1271
      %vm1278 = vweird.f32 %v1272
      %vm1279 = vmor %vm1277, %vm1278
      %v1280 = vsel %vm1279, %v1272, %v1276
      %v1281 = vand.u32 2147483647, %v1271
      %vm1282 = vcmp.eq.f32.partialorder %v1281, 8.507059e+37
      %v1283 = vand.u32 %v1271, 2147483648
      %v1284 = vor.u32 1.1754944e-38, %v1283
      %v1285 = vsel %vm1282, %v1284, %v1280
      %v1286 = vmul.f32 1.0, %v1285
      %v1287 = vmul.f32 %v1266, %v1245
      %v1288 = vadd.f32 %v1129, %v1287
      %v1289 = vtanh.pop %v1288
      %v1290 = vsub.f32 %v1113, %v1289
      %v1291 = vmul.f32 %v1286, %v1290
      %v1292 = vadd.f32 %v1289, %v1291
      %s1293 = scalar_lea.vmem [#allocation4], %s1121
      %v1294 = vld [vmem:[%s1293] sm:$0xff]
      %v1295 = vsub.f32 %v1292, %v1294
      %v1296 = vmul.f32 %v1130, %v1295
      %v1297 = vadd.f32 %v1296, %v1294
      %1298 = vst [vmem:[%s1126] sm:$0xff] %v1297
    $region66: #{tpu_custom_call.1} parent=1 // loop_footer
      %s581 = sadd.s32 1, %s577
    $region67: #{tpu_custom_call.1} parent=1 // loop_footer_branch
      %576 = sbr.rel target = $region63
    $region68: #{tpu_custom_call.1} parent=1 // loop_exit
      _
    %1299 = vst [vmem:[#allocation2] sm:$0xff] %v582
    %v1300 = vld [vmem:[#allocation3] sm:$0xff]
    %v1301 = vld [vmem:[#allocation3 + $0x20] sm:$0xff]
    %v1302 = vld [vmem:[#allocation3 + $0x40] sm:$0xff]
    %v1303 = vld [vmem:[#allocation3 + $0x60] sm:$0xff]
    %v1304 = vld [vmem:[#allocation3 + $0x80] sm:$0xff]
    %v1305 = vld [vmem:[#allocation3 + $0xa0] sm:$0xff]
    %v1306 = vld [vmem:[#allocation3 + $0xc0] sm:$0xff]
    %v1307 = vld [vmem:[#allocation3 + $0xe0] sm:$0xff]
    %v1308 = vld [vmem:[#allocation13] sm:$0xff]
    %v1309 = vld [vmem:[#allocation13 + $0x8] sm:$0xff]
    %v1310 = vld [vmem:[#allocation13 + $0x10] sm:$0xff]
    %v1311 = vld [vmem:[#allocation13 + $0x18] sm:$0xff]
    %v1312 = vld [vmem:[#allocation13 + $0x20] sm:$0xff]
    %v1313 = vld [vmem:[#allocation13 + $0x28] sm:$0xff]
    %v1314 = vld [vmem:[#allocation13 + $0x30] sm:$0xff]
    %v1315 = vld [vmem:[#allocation13 + $0x38] sm:$0xff]
    %v1316 = vld [vmem:[#allocation13 + $0x40] sm:$0xff]
    %v1317 = vld [vmem:[#allocation13 + $0x48] sm:$0xff]
    %v1318 = vld [vmem:[#allocation13 + $0x50] sm:$0xff]
    %v1319 = vld [vmem:[#allocation13 + $0x58] sm:$0xff]
    %v1320 = vld [vmem:[#allocation13 + $0x60] sm:$0xff]
    %v1321 = vld [vmem:[#allocation13 + $0x68] sm:$0xff]
    %v1322 = vld [vmem:[#allocation13 + $0x70] sm:$0xff]
    %v1323 = vld [vmem:[#allocation13 + $0x78] sm:$0xff]
    %v1324 = vld [vmem:[%s7] sm:$0x1]
    %v1326 = vperm.slane %v1324, 0
    %1328 = vmatpush.msra.mxu0 %v1323
    %1329 = vmatpush.msra.mxu0 %v1322
    %1330 = vmatpush.msra.mxu0 %v1321
    %1331 = vmatpush.msra.mxu0 %v1320
    %1332 = vmatpush.msra.mxu0 %v1319
    %1333 = vmatpush.msra.mxu0 %v1318
    %1334 = vmatpush.msra.mxu0 %v1317
    %1335 = vmatpush.msra.mxu0 %v1316
    %1336 = vmatpush.msra.mxu0 %v1315
    %1337 = vmatpush.msra.mxu0 %v1314
    %1338 = vmatpush.msra.mxu0 %v1313
    %1339 = vmatpush.msra.mxu0 %v1312
    %1340 = vmatpush.msra.mxu0 %v1311
    %1341 = vmatpush.msra.mxu0 %v1310
    %1342 = vmatpush.msra.mxu0 %v1309
    %1343 = vmatpush.msra.mxu0 %v1308
    %1344 = vmatmul.f32.gmra.mxu0 %v1300
    %v1345 = vpop.f32.mrf.mxu0
    %v1346 = vadd.f32 %v1326, %v1345
    %1347 = vmatmul.f32.gmra.mxu0 %v1301
    %v1348 = vpop.f32.mrf.mxu0
    %v1349 = vadd.f32 %v1326, %v1348
    %1350 = vmatmul.f32.gmra.mxu0 %v1302
    %v1351 = vpop.f32.mrf.mxu0
    %v1352 = vadd.f32 %v1326, %v1351
    %1353 = vmatmul.f32.gmra.mxu0 %v1303
    %v1354 = vpop.f32.mrf.mxu0
    %v1355 = vadd.f32 %v1326, %v1354
    %1356 = vmatmul.f32.gmra.mxu0 %v1304
    %v1357 = vpop.f32.mrf.mxu0
    %v1358 = vadd.f32 %v1326, %v1357
    %1359 = vmatmul.f32.gmra.mxu0 %v1305
    %v1360 = vpop.f32.mrf.mxu0
    %v1361 = vadd.f32 %v1326, %v1360
    %1362 = vmatmul.f32.gmra.mxu0 %v1306
    %v1363 = vpop.f32.mrf.mxu0
    %v1364 = vadd.f32 %v1326, %v1363
    %1365 = vmatmul.f32.gmra.mxu0 %v1307
    %v1366 = vpop.f32.mrf.mxu0
    %v1367 = vadd.f32 %v1326, %v1366
    %1368 = vdwg.mxu0
    %1369 = vst [vmem:[#allocation15] sm:$0xff] %v1346
    %1370 = vst [vmem:[#allocation15 + $0x8] sm:$0xff] %v1349
    %1371 = vst [vmem:[#allocation15 + $0x10] sm:$0xff] %v1352
    %1372 = vst [vmem:[#allocation15 + $0x18] sm:$0xff] %v1355
    %1373 = vst [vmem:[#allocation15 + $0x20] sm:$0xff] %v1358
    %1374 = vst [vmem:[#allocation15 + $0x28] sm:$0xff] %v1361
    %1375 = vst [vmem:[#allocation15 + $0x30] sm:$0xff] %v1364
    %1376 = vst [vmem:[#allocation15 + $0x38] sm:$0xff] %v1367
    // Predicated region
    $region69: #{tpu_custom_call.1} parent=1 // pred_check
      %p1377 = pneg %p123
    $region70: #{tpu_custom_call.1} parent=1 // pred_check_branch
      %1379 = sbr.rel (%p1377) target = $region72
    $region71: #{tpu_custom_call.1} parent=1 // pred_region
      %1380 = vst [vmem:[#allocation16] sm:$0xff] %v582
    $region72: #{tpu_custom_call.1} parent=1 // pred_fallthru
      _
    // Predicated region
    $region73: #{tpu_custom_call.1} parent=1 // pred_check
      _
    $region74: #{tpu_custom_call.1} parent=1 // pred_check_branch
      %1382 = sbr.rel (0) target = $region76
    $region75: #{tpu_custom_call.1} parent=1 // pred_region
      %1384 = vsyncadd [#allocation6], 0
      %s1385 = sshll.u32 [#allocation15], 4
      %s1386 = int_to_ptr.vmem [resolvable:$true] %s1385
      %s1387 = sshll.u32 %s8, 4
      %s1388 = int_to_ptr.hbm [resolvable:$true] %s1387
      %1393 = dma.vmem_to_hbm [thread:$0]  %s1386, 1024, %s1388, [#allocation6], 128, 128, 8
    $region76: #{tpu_custom_call.1} parent=1 // pred_fallthru
      _
    // Predicated region
    $region77: #{tpu_custom_call.1} parent=1 // pred_check
      _
    $region78: #{tpu_custom_call.1} parent=1 // pred_check_branch
      %1395 = sbr.rel (0) target = $region80
    $region79: #{tpu_custom_call.1} parent=1 // pred_region
      %1397 = vsyncadd [#allocation17], 0
      %s1399 = sshll.u32 [#allocation16], 4
      %s1400 = int_to_ptr.vmem [resolvable:$true] %s1399
      %s1401 = sshll.u32 %s9, 4
      %s1402 = int_to_ptr.hbm [resolvable:$true] %s1401
      %1404 = dma.vmem_to_hbm [thread:$0]  %s1400, 128, %s1402, [#allocation17]
    $region80: #{tpu_custom_call.1} parent=1 // pred_fallthru
      _
    // Predicated region
    $region81: #{tpu_custom_call.1} parent=1 // pred_check
      _
    $region82: #{tpu_custom_call.1} parent=1 // pred_check_branch
      %1406 = sbr.rel (0) target = $region84
    $region83: #{tpu_custom_call.1} parent=1 // pred_region
      %1408 = dma.done [#allocation6], 1024
    $region84: #{tpu_custom_call.1} parent=1 // pred_fallthru
      _
    // Predicated region
    $region85: #{tpu_custom_call.1} parent=1 // pred_check
      _
    $region86: #{tpu_custom_call.1} parent=1 // pred_check_branch
      %1410 = sbr.rel (0) target = $region88
    $region87: #{tpu_custom_call.1} parent=1 // pred_region
      %1412 = dma.done [#allocation17], 128
    $region88: #{tpu_custom_call.1} parent=1 // pred_fallthru
      _
    %1413 = vsyncpa [#allocation5], 1
    %1414 = vsyncpa [#allocation8], 1
    %1415 = vsyncpa [#allocation11], 1
    %1416 = vsyncpa [#allocation14], 1
    %1417 = vsyncpa [#allocation6], 1
    %1418 = vsyncpa [#allocation17], 1

</llo_original>
